<compile_context>
chip_gen: v7x
topology: tpu7x:2x2x1
jax: 0.10.0
libtpu: 0.0.40
codegen_flags: <defaults>
</compile_context>

<pallas_src>
import math

import numpy as np
import jax
import jax.numpy as jnp
from jax import lax
from jax.experimental import pallas as pl
from jax.experimental.pallas import tpu as pltpu


# ----------------------------------------------------------------------------
# Kernel 1: OmniShift folded into one depthwise 5x5 conv (NHWC).
#   - halo staged in VMEM, only the 2-pixel border is zeroed
#   - emits H-major AND W-major activations (no wrapper HBM transpose)
# ----------------------------------------------------------------------------

def _dwconv5x5_kernel(x_ref, taps_ref, ohw_ref, owh_ref, xpad_scr):
    # x_ref: (1, H, W, C); taps_ref: (25, C); ohw_ref: (1, H, W, C);
    # owh_ref: (1, W, H, C); xpad_scr: (H+4, W+16, C) VMEM halo buffer.
    _, H, W, C = ohw_ref.shape
    # Zero only the halo border (full-scratch memset is pure vst traffic).
    xpad_scr[0:2, :, :] = jnp.zeros((2, W + 16, C), jnp.float32)
    xpad_scr[H + 2:H + 4, :, :] = jnp.zeros((2, W + 16, C), jnp.float32)
    xpad_scr[2:2 + H, 0:8, :] = jnp.zeros((H, 8, C), jnp.float32)
    xpad_scr[2:2 + H, W + 8:W + 16, :] = jnp.zeros((H, 8, C), jnp.float32)
    # Image at row offset 2 (major) and sublane offset 8 (aligned store).
    xpad_scr[2:2 + H, 8:8 + W, :] = x_ref[0]
    acc = jnp.zeros((H, W, C), jnp.float32)
    for dy in range(5):                      # static 25-tap unroll
        for dx in range(5):
            acc = acc + (xpad_scr[dy:dy + H, 6 + dx:6 + dx + W, :]
                         * taps_ref[dy * 5 + dx, :])
    ohw_ref[0] = acc.astype(ohw_ref.dtype)
    # W-major (b (h w) c -> b (w h) c) sequence produced on-chip.
    owh_ref[0] = pltpu.einshape("hwc->whc", acc).astype(owh_ref.dtype)
    # TODO(synk): for large H, tile the grid over row strips (4-row halo) to
    # bound the (H, W, C) accumulator VMEM/vreg footprint.


def pallas_dwconv5x5(x_nhwc, taps):
    """Depthwise 5x5 conv, padding=2, no bias. taps: (25, C) row-major 5x5.

    Returns (y_hw, y_wh): the conv output in H-major and W-major layouts."""
    B, H, W, C = x_nhwc.shape
    return pl.pallas_call(
        _dwconv5x5_kernel,
        out_shape=(jax.ShapeDtypeStruct((B, H, W, C), jnp.float32),
                   jax.ShapeDtypeStruct((B, W, H, C), jnp.float32)),
        grid=(B,),
        in_specs=[pl.BlockSpec((1, H, W, C), lambda b: (b, 0, 0, 0)),
                  pl.BlockSpec((25, C), lambda b: (0, 0))],
        out_specs=(pl.BlockSpec((1, H, W, C), lambda b: (b, 0, 0, 0)),
                   pl.BlockSpec((1, W, H, C), lambda b: (b, 0, 0, 0))),
        scratch_shapes=[pltpu.VMEM((H + 4, W + 16, C), jnp.float32)],
        compiler_params=pltpu.CompilerParams(
            dimension_semantics=("parallel",)),
    )(x_nhwc, taps)


# ----------------------------------------------------------------------------
# Kernel 2 ("tables"): fused k/v/r projections -> factored-exponential WKV
# tables + sigmoid(r) + exclusive per-block prefix/suffix carries.
#   P layout: [pn_h0 | pn_h1 | pd_h0 | pd_h1]   (prefix RHS, j < t direction)
#   Q layout: [qn_h0 | qn_h1 | qd_h0 | qd_h1]   (suffix RHS, j > t direction)
#   pn_j = e^{ w(j+1)} e^{k_j - M} v_j ,  pd_j = e^{ w(j+1)} e^{k_j - M}
#   qn_j = e^{-w(j-1)} e^{k_j - M} v_j ,  qd_j = e^{-w(j-1)} e^{k_j - M}
# ----------------------------------------------------------------------------

def _tables_kernel(xs_ref, xsw_ref, wkvr_ref, wdec_ref,
                   p_ref, q_ref, sr_ref, pc_ref, qc_ref):
    T, C = xs_ref.shape[1], xs_ref.shape[2]
    nq = pc_ref.shape[1]
    tq = T // nq
    x0 = xs_ref[0]                               # (T, C)  H-major
    x1 = xsw_ref[0]                              # (T, C)  W-major
    # Fused projections: one (T,C)x(C,3C) matmul for head 0 (+r), (C,2C) head 1.
    kvr0 = jnp.dot(x0, wkvr_ref[...], preferred_element_type=jnp.float32)
    kv1 = jnp.dot(x1, wkvr_ref[:, :2 * C], preferred_element_type=jnp.float32)
    sr_ref[0] = jax.nn.sigmoid(kvr0[:, 2 * C:])  # sigmoid(r), hoisted once
    kc = jnp.concatenate([kvr0[:, :C], kv1[:, :C]], axis=1)        # (T, 2C)
    vc = jnp.concatenate([kvr0[:, C:2 * C], kv1[:, C:]], axis=1)   # (T, 2C)

    wc = wdec_ref[...]                           # (1, 2C) per-head decay w
    # Global per-channel shift M is constant over t, so it cancels in num/den.
    # TODO(synk): trained decays with |w*T| >> 1 would need per-block renorm.
    kmax = jnp.max(kc, axis=0, keepdims=True)
    ek = jnp.exp(kc - kmax)                      # (T, 2C), <= 1
    ekv = ek * vc
    ts = lax.broadcasted_iota(jnp.int32, (T, 1), 0).astype(jnp.float32)
    awp = jnp.exp(wc * (ts + 1.0))               # e^{ w (j+1)}
    bwp = jnp.exp(-wc * (ts - 1.0))              # e^{-w (j-1)}
    p = jnp.concatenate([awp * ekv, awp * ek], axis=1)     # (T, 4C)
    q = jnp.concatenate([bwp * ekv, bwp * ek], axis=1)     # (T, 4C)
    p_ref[0] = p
    q_ref[0] = q

    # Exclusive per-block carries: pc[i] = sum_{j <  i*tq} p_j ,
    #                              qc[i] = sum_{j >= (i+1)*tq} q_j  (reverse
    # carry -> no total-minus-prefix cancellation).
    zero = jnp.zeros((1, 4 * C), jnp.float32)
    runp = zero
    pc_rows = []
    for i in range(nq):
        pc_rows.append(runp)
        runp = runp + jnp.sum(p[i * tq:(i + 1) * tq, :], axis=0, keepdims=True)
    pc_ref[0] = jnp.concatenate(pc_rows, axis=0)
    runq = zero
    qc_rows = [zero] * nq
    for i in range(nq - 1, -1, -1):
        qc_rows[i] = runq
        runq = runq + jnp.sum(q[i * tq:(i + 1) * tq, :], axis=0, keepdims=True)
    qc_ref[0] = jnp.concatenate(qc_rows, axis=0)
    # TODO(synk): for very large T also tile this kernel over T (two-pass kmax)
    # so the (T, 4C) tables are never fully VMEM-resident.


# ----------------------------------------------------------------------------
# Kernel 3 ("blocks"): per query-block WKV finalize + sigmoid(r) gate +
# output projection.  Fully parallel grid; carries are precomputed.
# ----------------------------------------------------------------------------

def _wkv_block_kernel(p_ref, q_ref, sr_ref, pc_ref, qc_ref,
                      wdec_ref, ufirst_ref, wout_ref, o_ref):
    tq = o_ref.shape[1]
    C = o_ref.shape[2]
    qi = pl.program_id(1)
    t0 = qi * tq

    pb = p_ref[0]                                # (tq, 4C) this block's rows
    qb = q_ref[0]
    ri = lax.broadcasted_iota(jnp.int32, (tq, tq), 0)
    ci = lax.broadcasted_iota(jnp.int32, (tq, tq), 1)
    lmask = (ci < ri).astype(jnp.float32)        # strictly lower:  j < t
    umask = (ci > ri).astype(jnp.float32)        # strictly upper:  j > t
    # (tq, tq) @ (tq, 4C) MXU matmuls + exclusive block carries.
    lower = (jnp.dot(lmask, pb, preferred_element_type=jnp.float32)
             + pc_ref[0, pl.ds(qi, 1), :])
    upper = (jnp.dot(umask, qb, preferred_element_type=jnp.float32)
             + qc_ref[0, pl.ds(qi, 1), :])

    wc = wdec_ref[...]                           # (1, 2C)
    uc = ufirst_ref[...]                         # (1, 2C)
    ts = (lax.broadcasted_iota(jnp.int32, (tq, 1), 0) + t0).astype(jnp.float32)
    awc = jnp.exp(wc * ts)                       # recomputed per block (EUP)
    bwc = jnp.exp(-wc * ts)
    euwc = jnp.exp(uc - wc)                      # self term: e^{u}ekv = e^{u-w} bw pn
    aw4 = jnp.concatenate([awc, awc], axis=1)    # (tq, 4C)
    bw4 = jnp.concatenate([bwc, bwc], axis=1)
    eu4 = jnp.concatenate([euwc, euwc], axis=1)
    full = bw4 * lower + aw4 * upper + eu4 * bw4 * pb   # [num0|num1|den0|den1]
    num = full[:, :2 * C]
    den = full[:, 2 * C:]
    srq = sr_ref[0]                              # (tq, C)
    gated = num * pl.reciprocal(den, approx=True) * jnp.concatenate(
        [srq, srq], axis=1)                      # wkv * sigmoid(r), (tq, 2C)
    # Single fused output projection (tq, 2C) @ (2C, C).
    o_ref[0] = jnp.dot(gated, wout_ref[...],
                       preferred_element_type=jnp.float32).astype(o_ref.dtype)
    # TODO(synk): for C not a multiple of 128 the output store is lane-masked;
    # production configs should keep C (or a folded output layout) lane-dense.


def _pick_tq(T, tq):
    if tq is not None and tq % 8 == 0 and T % tq == 0:
        return tq
    top = min(T, 256)
    for cand in range(top - top % 8, 7, -8):
        if T % cand == 0:
            return cand
    return T


def pallas_spatialmix(xs, xs_w, params, tq=None):
    B, T, C = xs.shape
    tq = _pick_tq(T, tq)
    nq = T // tq
    wdec = (params["spatial_decay"] / T).reshape(1, 2 * C).astype(jnp.float32)
    ufir = (params["spatial_first"] / T).reshape(1, 2 * C).astype(jnp.float32)
    wkvr = jnp.concatenate([params["wk"], params["wv"], params["wr"]], axis=1)

    vmem_cap = 48 * 1024 * 1024
    p, q, sr, pc, qc = pl.pallas_call(
        _tables_kernel,
        out_shape=(jax.ShapeDtypeStruct((B, T, 4 * C), jnp.float32),
                   jax.ShapeDtypeStruct((B, T, 4 * C), jnp.float32),
                   jax.ShapeDtypeStruct((B, T, C), jnp.float32),
                   jax.ShapeDtypeStruct((B, nq, 4 * C), jnp.float32),
                   jax.ShapeDtypeStruct((B, nq, 4 * C), jnp.float32)),
        grid=(B,),
        in_specs=[pl.BlockSpec((1, T, C), lambda b: (b, 0, 0)),
                  pl.BlockSpec((1, T, C), lambda b: (b, 0, 0)),
                  pl.BlockSpec((C, 3 * C), lambda b: (0, 0)),
                  pl.BlockSpec((1, 2 * C), lambda b: (0, 0))],
        out_specs=(pl.BlockSpec((1, T, 4 * C), lambda b: (b, 0, 0)),
                   pl.BlockSpec((1, T, 4 * C), lambda b: (b, 0, 0)),
                   pl.BlockSpec((1, T, C), lambda b: (b, 0, 0)),
                   pl.BlockSpec((1, nq, 4 * C), lambda b: (b, 0, 0)),
                   pl.BlockSpec((1, nq, 4 * C), lambda b: (b, 0, 0))),
        compiler_params=pltpu.CompilerParams(
            dimension_semantics=("parallel",),
            vmem_limit_bytes=vmem_cap),
    )(xs, xs_w, wkvr, wdec)

    out = pl.pallas_call(
        _wkv_block_kernel,
        out_shape=jax.ShapeDtypeStruct((B, T, C), jnp.float32),
        grid=(B, nq),
        in_specs=[pl.BlockSpec((1, tq, 4 * C), lambda b, i: (b, i, 0)),
                  pl.BlockSpec((1, tq, 4 * C), lambda b, i: (b, i, 0)),
                  pl.BlockSpec((1, tq, C), lambda b, i: (b, i, 0)),
                  pl.BlockSpec((1, nq, 4 * C), lambda b, i: (b, 0, 0)),
                  pl.BlockSpec((1, nq, 4 * C), lambda b, i: (b, 0, 0)),
                  pl.BlockSpec((1, 2 * C), lambda b, i: (0, 0)),
                  pl.BlockSpec((1, 2 * C), lambda b, i: (0, 0)),
                  pl.BlockSpec((2 * C, C), lambda b, i: (0, 0))],
        out_specs=pl.BlockSpec((1, tq, C), lambda b, i: (b, i, 0)),
        compiler_params=pltpu.CompilerParams(
            dimension_semantics=("parallel", "parallel"),
            vmem_limit_bytes=vmem_cap),
    )(p, q, sr, pc, qc, wdec, ufir, params["wout"])
    return out


# ----------------------------------------------------------------------------
# Parameters (deterministic) + forward wrapper
# ----------------------------------------------------------------------------

def init_params(key, n_embd):
    C = n_embd
    ks = jax.random.split(key, 10)
    alpha = jax.random.normal(ks[0], (4,), jnp.float32)
    w1 = jax.random.normal(ks[1], (C, 1, 1), jnp.float32) * 0.1
    w3 = jax.random.normal(ks[2], (C, 3, 3), jnp.float32) * 0.1
    w5 = jax.random.normal(ks[3], (C, 5, 5), jnp.float32) * 0.1
    wk = jax.random.normal(ks[4], (C, C), jnp.float32) / math.sqrt(C)
    wv = jax.random.normal(ks[5], (C, C), jnp.float32) / math.sqrt(C)
    wr = jax.random.normal(ks[6], (C, C), jnp.float32) / math.sqrt(C)
    wout = jax.random.normal(ks[7], (2 * C, C), jnp.float32) / math.sqrt(2 * C)
    spatial_decay = jax.random.normal(ks[8], (2 * C,), jnp.float32)
    spatial_first = jax.random.normal(ks[9], (2 * C,), jnp.float32)

    # OmniShift: alpha0*x + alpha1*dwconv1x1 + alpha2*dwconv3x3 + alpha3*dwconv5x5
    # folded into a single 5x5 depthwise kernel.
    taps = alpha[3] * w5
    taps = taps.at[:, 1:4, 1:4].add(alpha[2] * w3)
    taps = taps.at[:, 2:3, 2:3].add(alpha[1] * w1)
    taps = taps.at[:, 2, 2].add(alpha[0])
    shift_taps = taps.transpose(1, 2, 0).reshape(25, C)          # (25, C)

    return dict(shift_taps=shift_taps, wk=wk, wv=wv, wr=wr, wout=wout,
                spatial_decay=spatial_decay, spatial_first=spatial_first)
    # TODO(synk): key_norm LayerNorm branch not implemented (module default
    # key_norm=False, so it is skipped).


def vrwkv_multi_hw_spatialmix_forward(params, x, resolution, tq=None):
    B, T, C = x.shape
    h, w = resolution
    assert T == h * w
    xs_hw, xs_wh = pallas_dwconv5x5(x.reshape(B, h, w, C), params["shift_taps"])
    xs = xs_hw.reshape(B, T, C)                                  # H-major scan
    xs_w = xs_wh.reshape(B, T, C)                                # W-major scan
    return pallas_spatialmix(xs, xs_w, params, tq)


# ----------------------------------------------------------------------------
# Pure-JAX reference (mirrors the PyTorch module)
# ----------------------------------------------------------------------------

def reference_forward(params, x, resolution):
    B, T, C = x.shape
    h, w = resolution
    rhs = params["shift_taps"].reshape(5, 5, 1, C)
    xs = lax.conv_general_dilated(
        x.reshape(B, h, w, C), rhs, window_strides=(1, 1),
        padding=((2, 2), (2, 2)),
        dimension_numbers=("NHWC", "HWIO", "NHWC"),
        feature_group_count=C).reshape(B, T, C)

    k = xs @ params["wk"]
    v = xs @ params["wv"]
    r = xs @ params["wr"]
    sr = jax.nn.sigmoid(r)

    def hw_to_wh(a):  # rearrange 'b (h w) c -> b (w h) c'
        return a.reshape(B, h, w, C).transpose(0, 2, 1, 3).reshape(B, T, C)

    ks = jnp.concatenate([k, hw_to_wh(k)], axis=-1)              # (B, T, 2C)
    vs = jnp.concatenate([v, hw_to_wh(v)], axis=-1)
    srs = jnp.concatenate([sr, sr], axis=-1)

    wd = params["spatial_decay"] / T
    u = params["spatial_first"] / T
    ti = jnp.arange(T)[:, None]
    ji = jnp.arange(T)[None, :]
    dist = (jnp.abs(ti - ji) - 1).astype(jnp.float32)
    bias = jnp.where((ti == ji)[:, :, None], u[None, None, :],
                     -wd[None, None, :] * dist[:, :, None])      # (T, T, 2C)
    e = ks[:, None, :, :] + bias[None]                           # (B, Tq, Tk, 2C)
    m = e.max(axis=2, keepdims=True)
    ex = jnp.exp(e - m)
    p = (ex * vs[:, None, :, :]).sum(axis=2)
    q = ex.sum(axis=2)
    wkv = p / q

    y = (wkv * srs).reshape(B * T, 2 * C) @ params["wout"]
    return y.reshape(B, T, C)


# ----------------------------------------------------------------------------
# Main
# ----------------------------------------------------------------------------

if __name__ == "__main__":
    n_embd = 32
    B, hh, ww = 2, 8, 8
    T = hh * ww
    resolution = (hh, ww)

    key = jax.random.PRNGKey(0)
    kp, kx = jax.random.split(key)
    params = init_params(kp, n_embd)
    x = jax.random.normal(kx, (B, T, n_embd), jnp.float32)

    # tq=16 here only to exercise the multi-block carry path at this tiny T;
    # the default picker chooses tq up to 256 for realistic sequence lengths.
    out = vrwkv_multi_hw_spatialmix_forward(params, x, resolution, tq=16)
    out = jax.block_until_ready(out)

    ref = jax.block_until_ready(reference_forward(params, x, resolution))
    np.testing.assert_allclose(np.asarray(out), np.asarray(ref),
                               rtol=2e-3, atol=2e-3)

    print("KERNEL_OK")
</pallas_src>

<mosaic_0001>
module attributes {stable_mosaic.version = 11 : i64} {
  func.func @_dwconv5x5_kernel(%arg0: i32, %arg1: memref<1x8x8x32xf32, #tpu.memory_space<vmem>>, %arg2: memref<25x32xf32, #tpu.memory_space<vmem>>, %arg3: memref<1x8x8x32xf32, #tpu.memory_space<vmem>>, %arg4: memref<1x8x8x32xf32, #tpu.memory_space<vmem>>, %arg5: memref<12x24x32xf32, #tpu.memory_space<vmem>>) attributes {dimension_semantics = [#tpu.dimension_semantics<parallel>], iteration_bounds = array<i64: 2>, scalar_prefetch = 0 : i64, scratch_operands = 1 : i64, tpu.core_type = #tpu.core_type<tc>, window_params = [{transform_indices = @transform_0, window_bounds = array<i64: 1, 8, 8, 32>}, {pipeline_mode = #tpu.pipeline_mode<synchronous>, transform_indices = @transform_1, window_bounds = array<i64: 25, 32>}, {transform_indices = @transform_2, window_bounds = array<i64: 1, 8, 8, 32>}, {transform_indices = @transform_3, window_bounds = array<i64: 1, 8, 8, 32>}]} {
    %cst = arith.constant 0.000000e+00 : f32
    %0 = vector.broadcast %cst : f32 to vector<2x24x32xf32>
    %c0 = arith.constant 0 : index
    %c0_0 = arith.constant 0 : index
    %c0_1 = arith.constant 0 : index
    %1 = vector.load %arg5[%c0, %c0_0, %c0_1] : memref<12x24x32xf32, #tpu.memory_space<vmem>>, vector<2x24x32xf32>
    tpu.vector_store %arg5[%c0, %c0_0, %c0_1], %0 {strides = array<i32>} : memref<12x24x32xf32, #tpu.memory_space<vmem>>, vector<2x24x32xf32>,
    %cst_2 = arith.constant 0.000000e+00 : f32
    %2 = vector.broadcast %cst_2 : f32 to vector<2x24x32xf32>
    %c10 = arith.constant 10 : index
    %c0_3 = arith.constant 0 : index
    %c0_4 = arith.constant 0 : index
    %3 = vector.load %arg5[%c10, %c0_3, %c0_4] : memref<12x24x32xf32, #tpu.memory_space<vmem>>, vector<2x24x32xf32>
    tpu.vector_store %arg5[%c10, %c0_3, %c0_4], %2 {strides = array<i32>} : memref<12x24x32xf32, #tpu.memory_space<vmem>>, vector<2x24x32xf32>,
    %cst_5 = arith.constant 0.000000e+00 : f32
    %4 = vector.broadcast %cst_5 : f32 to vector<8x8x32xf32>
    %c2 = arith.constant 2 : index
    %c0_6 = arith.constant 0 : index
    %c0_7 = arith.constant 0 : index
    %5 = vector.load %arg5[%c2, %c0_6, %c0_7] : memref<12x24x32xf32, #tpu.memory_space<vmem>>, vector<8x8x32xf32>
    tpu.vector_store %arg5[%c2, %c0_6, %c0_7], %4 {strides = array<i32>} : memref<12x24x32xf32, #tpu.memory_space<vmem>>, vector<8x8x32xf32>,
    %cst_8 = arith.constant 0.000000e+00 : f32
    %6 = vector.broadcast %cst_8 : f32 to vector<8x8x32xf32>
    %c2_9 = arith.constant 2 : index
    %c16 = arith.constant 16 : index
    %c0_10 = arith.constant 0 : index
    %7 = vector.load %arg5[%c2_9, %c16, %c0_10] : memref<12x24x32xf32, #tpu.memory_space<vmem>>, vector<8x8x32xf32>
    tpu.vector_store %arg5[%c2_9, %c16, %c0_10], %6 {strides = array<i32>} : memref<12x24x32xf32, #tpu.memory_space<vmem>>, vector<8x8x32xf32>,
    %c0_11 = arith.constant 0 : index
    %c0_12 = arith.constant 0 : index
    %c0_13 = arith.constant 0 : index
    %c0_14 = arith.constant 0 : index
    %8 = vector.load %arg1[%c0_11, %c0_12, %c0_13, %c0_14] : memref<1x8x8x32xf32, #tpu.memory_space<vmem>>, vector<1x8x8x32xf32>
    %9 = vector.shape_cast %8 : vector<1x8x8x32xf32> to vector<8x8x32xf32>
    %c2_15 = arith.constant 2 : index
    %c8 = arith.constant 8 : index
    %c0_16 = arith.constant 0 : index
    %10 = vector.load %arg5[%c2_15, %c8, %c0_16] : memref<12x24x32xf32, #tpu.memory_space<vmem>>, vector<8x8x32xf32>
    tpu.vector_store %arg5[%c2_15, %c8, %c0_16], %9 {strides = array<i32>} : memref<12x24x32xf32, #tpu.memory_space<vmem>>, vector<8x8x32xf32>,
    %cst_17 = arith.constant 0.000000e+00 : f32
    %11 = vector.broadcast %cst_17 : f32 to vector<8x8x32xf32>
    %c0_18 = arith.constant 0 : index
    %c6 = arith.constant 6 : index
    %c0_19 = arith.constant 0 : index
    %12 = vector.load %arg5[%c0_18, %c6, %c0_19] : memref<12x24x32xf32, #tpu.memory_space<vmem>>, vector<8x8x32xf32>
    %c0_20 = arith.constant 0 : index
    %c0_21 = arith.constant 0 : index
    %13 = vector.load %arg2[%c0_20, %c0_21] : memref<25x32xf32, #tpu.memory_space<vmem>>, vector<1x32xf32>
    %14 = vector.shape_cast %13 : vector<1x32xf32> to vector<32xf32>
    %15 = vector.shape_cast %14 : vector<32xf32> to vector<1x1x32xf32>
    %16 = vector.broadcast %15 : vector<1x1x32xf32> to vector<8x8x32xf32>
    %17 = arith.mulf %12, %16 : vector<8x8x32xf32>
    %18 = arith.addf %11, %17 : vector<8x8x32xf32>
    %c0_22 = arith.constant 0 : index
    %c7 = arith.constant 7 : index
    %c0_23 = arith.constant 0 : index
    %19 = vector.load %arg5[%c0_22, %c7, %c0_23] : memref<12x24x32xf32, #tpu.memory_space<vmem>>, vector<8x8x32xf32>
    %c1 = arith.constant 1 : index
    %c0_24 = arith.constant 0 : index
    %20 = vector.load %arg2[%c1, %c0_24] : memref<25x32xf32, #tpu.memory_space<vmem>>, vector<1x32xf32>
    %21 = vector.shape_cast %20 : vector<1x32xf32> to vector<32xf32>
    %22 = vector.shape_cast %21 : vector<32xf32> to vector<1x1x32xf32>
    %23 = vector.broadcast %22 : vector<1x1x32xf32> to vector<8x8x32xf32>
    %24 = arith.mulf %19, %23 : vector<8x8x32xf32>
    %25 = arith.addf %18, %24 : vector<8x8x32xf32>
    %c0_25 = arith.constant 0 : index
    %c8_26 = arith.constant 8 : index
    %c0_27 = arith.constant 0 : index
    %26 = vector.load %arg5[%c0_25, %c8_26, %c0_27] : memref<12x24x32xf32, #tpu.memory_space<vmem>>, vector<8x8x32xf32>
    %c2_28 = arith.constant 2 : index
    %c0_29 = arith.constant 0 : index
    %27 = vector.load %arg2[%c2_28, %c0_29] : memref<25x32xf32, #tpu.memory_space<vmem>>, vector<1x32xf32>
    %28 = vector.shape_cast %27 : vector<1x32xf32> to vector<32xf32>
    %29 = vector.shape_cast %28 : vector<32xf32> to vector<1x1x32xf32>
    %30 = vector.broadcast %29 : vector<1x1x32xf32> to vector<8x8x32xf32>
    %31 = arith.mulf %26, %30 : vector<8x8x32xf32>
    %32 = arith.addf %25, %31 : vector<8x8x32xf32>
    %c0_30 = arith.constant 0 : index
    %c9 = arith.constant 9 : index
    %c0_31 = arith.constant 0 : index
    %33 = vector.load %arg5[%c0_30, %c9, %c0_31] : memref<12x24x32xf32, #tpu.memory_space<vmem>>, vector<8x8x32xf32>
    %c3 = arith.constant 3 : index
    %c0_32 = arith.constant 0 : index
    %34 = vector.load %arg2[%c3, %c0_32] : memref<25x32xf32, #tpu.memory_space<vmem>>, vector<1x32xf32>
    %35 = vector.shape_cast %34 : vector<1x32xf32> to vector<32xf32>
    %36 = vector.shape_cast %35 : vector<32xf32> to vector<1x1x32xf32>
    %37 = vector.broadcast %36 : vector<1x1x32xf32> to vector<8x8x32xf32>
    %38 = arith.mulf %33, %37 : vector<8x8x32xf32>
    %39 = arith.addf %32, %38 : vector<8x8x32xf32>
    %c0_33 = arith.constant 0 : index
    %c10_34 = arith.constant 10 : index
    %c0_35 = arith.constant 0 : index
    %40 = vector.load %arg5[%c0_33, %c10_34, %c0_35] : memref<12x24x32xf32, #tpu.memory_space<vmem>>, vector<8x8x32xf32>
    %c4 = arith.constant 4 : index
    %c0_36 = arith.constant 0 : index
    %41 = vector.load %arg2[%c4, %c0_36] : memref<25x32xf32, #tpu.memory_space<vmem>>, vector<1x32xf32>
    %42 = vector.shape_cast %41 : vector<1x32xf32> to vector<32xf32>
    %43 = vector.shape_cast %42 : vector<32xf32> to vector<1x1x32xf32>
    %44 = vector.broadcast %43 : vector<1x1x32xf32> to vector<8x8x32xf32>
    %45 = arith.mulf %40, %44 : vector<8x8x32xf32>
    %46 = arith.addf %39, %45 : vector<8x8x32xf32>
    %c1_37 = arith.constant 1 : index
    %c6_38 = arith.constant 6 : index
    %c0_39 = arith.constant 0 : index
    %47 = vector.load %arg5[%c1_37, %c6_38, %c0_39] : memref<12x24x32xf32, #tpu.memory_space<vmem>>, vector<8x8x32xf32>
    %c5 = arith.constant 5 : index
    %c0_40 = arith.constant 0 : index
    %48 = vector.load %arg2[%c5, %c0_40] : memref<25x32xf32, #tpu.memory_space<vmem>>, vector<1x32xf32>
    %49 = vector.shape_cast %48 : vector<1x32xf32> to vector<32xf32>
    %50 = vector.shape_cast %49 : vector<32xf32> to vector<1x1x32xf32>
    %51 = vector.broadcast %50 : vector<1x1x32xf32> to vector<8x8x32xf32>
    %52 = arith.mulf %47, %51 : vector<8x8x32xf32>
    %53 = arith.addf %46, %52 : vector<8x8x32xf32>
    %c1_41 = arith.constant 1 : index
    %c7_42 = arith.constant 7 : index
    %c0_43 = arith.constant 0 : index
    %54 = vector.load %arg5[%c1_41, %c7_42, %c0_43] : memref<12x24x32xf32, #tpu.memory_space<vmem>>, vector<8x8x32xf32>
    %c6_44 = arith.constant 6 : index
    %c0_45 = arith.constant 0 : index
    %55 = vector.load %arg2[%c6_44, %c0_45] : memref<25x32xf32, #tpu.memory_space<vmem>>, vector<1x32xf32>
    %56 = vector.shape_cast %55 : vector<1x32xf32> to vector<32xf32>
    %57 = vector.shape_cast %56 : vector<32xf32> to vector<1x1x32xf32>
    %58 = vector.broadcast %57 : vector<1x1x32xf32> to vector<8x8x32xf32>
    %59 = arith.mulf %54, %58 : vector<8x8x32xf32>
    %60 = arith.addf %53, %59 : vector<8x8x32xf32>
    %c1_46 = arith.constant 1 : index
    %c8_47 = arith.constant 8 : index
    %c0_48 = arith.constant 0 : index
    %61 = vector.load %arg5[%c1_46, %c8_47, %c0_48] : memref<12x24x32xf32, #tpu.memory_space<vmem>>, vector<8x8x32xf32>
    %c7_49 = arith.constant 7 : index
    %c0_50 = arith.constant 0 : index
    %62 = vector.load %arg2[%c7_49, %c0_50] : memref<25x32xf32, #tpu.memory_space<vmem>>, vector<1x32xf32>
    %63 = vector.shape_cast %62 : vector<1x32xf32> to vector<32xf32>
    %64 = vector.shape_cast %63 : vector<32xf32> to vector<1x1x32xf32>
    %65 = vector.broadcast %64 : vector<1x1x32xf32> to vector<8x8x32xf32>
    %66 = arith.mulf %61, %65 : vector<8x8x32xf32>
    %67 = arith.addf %60, %66 : vector<8x8x32xf32>
    %c1_51 = arith.constant 1 : index
    %c9_52 = arith.constant 9 : index
    %c0_53 = arith.constant 0 : index
    %68 = vector.load %arg5[%c1_51, %c9_52, %c0_53] : memref<12x24x32xf32, #tpu.memory_space<vmem>>, vector<8x8x32xf32>
    %c8_54 = arith.constant 8 : index
    %c0_55 = arith.constant 0 : index
    %69 = vector.load %arg2[%c8_54, %c0_55] : memref<25x32xf32, #tpu.memory_space<vmem>>, vector<1x32xf32>
    %70 = vector.shape_cast %69 : vector<1x32xf32> to vector<32xf32>
    %71 = vector.shape_cast %70 : vector<32xf32> to vector<1x1x32xf32>
    %72 = vector.broadcast %71 : vector<1x1x32xf32> to vector<8x8x32xf32>
    %73 = arith.mulf %68, %72 : vector<8x8x32xf32>
    %74 = arith.addf %67, %73 : vector<8x8x32xf32>
    %c1_56 = arith.constant 1 : index
    %c10_57 = arith.constant 10 : index
    %c0_58 = arith.constant 0 : index
    %75 = vector.load %arg5[%c1_56, %c10_57, %c0_58] : memref<12x24x32xf32, #tpu.memory_space<vmem>>, vector<8x8x32xf32>
    %c9_59 = arith.constant 9 : index
    %c0_60 = arith.constant 0 : index
    %76 = vector.load %arg2[%c9_59, %c0_60] : memref<25x32xf32, #tpu.memory_space<vmem>>, vector<1x32xf32>
    %77 = vector.shape_cast %76 : vector<1x32xf32> to vector<32xf32>
    %78 = vector.shape_cast %77 : vector<32xf32> to vector<1x1x32xf32>
    %79 = vector.broadcast %78 : vector<1x1x32xf32> to vector<8x8x32xf32>
    %80 = arith.mulf %75, %79 : vector<8x8x32xf32>
    %81 = arith.addf %74, %80 : vector<8x8x32xf32>
    %c2_61 = arith.constant 2 : index
    %c6_62 = arith.constant 6 : index
    %c0_63 = arith.constant 0 : index
    %82 = vector.load %arg5[%c2_61, %c6_62, %c0_63] : memref<12x24x32xf32, #tpu.memory_space<vmem>>, vector<8x8x32xf32>
    %c10_64 = arith.constant 10 : index
    %c0_65 = arith.constant 0 : index
    %83 = vector.load %arg2[%c10_64, %c0_65] : memref<25x32xf32, #tpu.memory_space<vmem>>, vector<1x32xf32>
    %84 = vector.shape_cast %83 : vector<1x32xf32> to vector<32xf32>
    %85 = vector.shape_cast %84 : vector<32xf32> to vector<1x1x32xf32>
    %86 = vector.broadcast %85 : vector<1x1x32xf32> to vector<8x8x32xf32>
    %87 = arith.mulf %82, %86 : vector<8x8x32xf32>
    %88 = arith.addf %81, %87 : vector<8x8x32xf32>
    %c2_66 = arith.constant 2 : index
    %c7_67 = arith.constant 7 : index
    %c0_68 = arith.constant 0 : index
    %89 = vector.load %arg5[%c2_66, %c7_67, %c0_68] : memref<12x24x32xf32, #tpu.memory_space<vmem>>, vector<8x8x32xf32>
    %c11 = arith.constant 11 : index
    %c0_69 = arith.constant 0 : index
    %90 = vector.load %arg2[%c11, %c0_69] : memref<25x32xf32, #tpu.memory_space<vmem>>, vector<1x32xf32>
    %91 = vector.shape_cast %90 : vector<1x32xf32> to vector<32xf32>
    %92 = vector.shape_cast %91 : vector<32xf32> to vector<1x1x32xf32>
    %93 = vector.broadcast %92 : vector<1x1x32xf32> to vector<8x8x32xf32>
    %94 = arith.mulf %89, %93 : vector<8x8x32xf32>
    %95 = arith.addf %88, %94 : vector<8x8x32xf32>
    %c2_70 = arith.constant 2 : index
    %c8_71 = arith.constant 8 : index
    %c0_72 = arith.constant 0 : index
    %96 = vector.load %arg5[%c2_70, %c8_71, %c0_72] : memref<12x24x32xf32, #tpu.memory_space<vmem>>, vector<8x8x32xf32>
    %c12 = arith.constant 12 : index
    %c0_73 = arith.constant 0 : index
    %97 = vector.load %arg2[%c12, %c0_73] : memref<25x32xf32, #tpu.memory_space<vmem>>, vector<1x32xf32>
    %98 = vector.shape_cast %97 : vector<1x32xf32> to vector<32xf32>
    %99 = vector.shape_cast %98 : vector<32xf32> to vector<1x1x32xf32>
    %100 = vector.broadcast %99 : vector<1x1x32xf32> to vector<8x8x32xf32>
    %101 = arith.mulf %96, %100 : vector<8x8x32xf32>
    %102 = arith.addf %95, %101 : vector<8x8x32xf32>
    %c2_74 = arith.constant 2 : index
    %c9_75 = arith.constant 9 : index
    %c0_76 = arith.constant 0 : index
    %103 = vector.load %arg5[%c2_74, %c9_75, %c0_76] : memref<12x24x32xf32, #tpu.memory_space<vmem>>, vector<8x8x32xf32>
    %c13 = arith.constant 13 : index
    %c0_77 = arith.constant 0 : index
    %104 = vector.load %arg2[%c13, %c0_77] : memref<25x32xf32, #tpu.memory_space<vmem>>, vector<1x32xf32>
    %105 = vector.shape_cast %104 : vector<1x32xf32> to vector<32xf32>
    %106 = vector.shape_cast %105 : vector<32xf32> to vector<1x1x32xf32>
    %107 = vector.broadcast %106 : vector<1x1x32xf32> to vector<8x8x32xf32>
    %108 = arith.mulf %103, %107 : vector<8x8x32xf32>
    %109 = arith.addf %102, %108 : vector<8x8x32xf32>
    %c2_78 = arith.constant 2 : index
    %c10_79 = arith.constant 10 : index
    %c0_80 = arith.constant 0 : index
    %110 = vector.load %arg5[%c2_78, %c10_79, %c0_80] : memref<12x24x32xf32, #tpu.memory_space<vmem>>, vector<8x8x32xf32>
    %c14 = arith.constant 14 : index
    %c0_81 = arith.constant 0 : index
    %111 = vector.load %arg2[%c14, %c0_81] : memref<25x32xf32, #tpu.memory_space<vmem>>, vector<1x32xf32>
    %112 = vector.shape_cast %111 : vector<1x32xf32> to vector<32xf32>
    %113 = vector.shape_cast %112 : vector<32xf32> to vector<1x1x32xf32>
    %114 = vector.broadcast %113 : vector<1x1x32xf32> to vector<8x8x32xf32>
    %115 = arith.mulf %110, %114 : vector<8x8x32xf32>
    %116 = arith.addf %109, %115 : vector<8x8x32xf32>
    %c3_82 = arith.constant 3 : index
    %c6_83 = arith.constant 6 : index
    %c0_84 = arith.constant 0 : index
    %117 = vector.load %arg5[%c3_82, %c6_83, %c0_84] : memref<12x24x32xf32, #tpu.memory_space<vmem>>, vector<8x8x32xf32>
    %c15 = arith.constant 15 : index
    %c0_85 = arith.constant 0 : index
    %118 = vector.load %arg2[%c15, %c0_85] : memref<25x32xf32, #tpu.memory_space<vmem>>, vector<1x32xf32>
    %119 = vector.shape_cast %118 : vector<1x32xf32> to vector<32xf32>
    %120 = vector.shape_cast %119 : vector<32xf32> to vector<1x1x32xf32>
    %121 = vector.broadcast %120 : vector<1x1x32xf32> to vector<8x8x32xf32>
    %122 = arith.mulf %117, %121 : vector<8x8x32xf32>
    %123 = arith.addf %116, %122 : vector<8x8x32xf32>
    %c3_86 = arith.constant 3 : index
    %c7_87 = arith.constant 7 : index
    %c0_88 = arith.constant 0 : index
    %124 = vector.load %arg5[%c3_86, %c7_87, %c0_88] : memref<12x24x32xf32, #tpu.memory_space<vmem>>, vector<8x8x32xf32>
    %c16_89 = arith.constant 16 : index
    %c0_90 = arith.constant 0 : index
    %125 = vector.load %arg2[%c16_89, %c0_90] : memref<25x32xf32, #tpu.memory_space<vmem>>, vector<1x32xf32>
    %126 = vector.shape_cast %125 : vector<1x32xf32> to vector<32xf32>
    %127 = vector.shape_cast %126 : vector<32xf32> to vector<1x1x32xf32>
    %128 = vector.broadcast %127 : vector<1x1x32xf32> to vector<8x8x32xf32>
    %129 = arith.mulf %124, %128 : vector<8x8x32xf32>
    %130 = arith.addf %123, %129 : vector<8x8x32xf32>
    %c3_91 = arith.constant 3 : index
    %c8_92 = arith.constant 8 : index
    %c0_93 = arith.constant 0 : index
    %131 = vector.load %arg5[%c3_91, %c8_92, %c0_93] : memref<12x24x32xf32, #tpu.memory_space<vmem>>, vector<8x8x32xf32>
    %c17 = arith.constant 17 : index
    %c0_94 = arith.constant 0 : index
    %132 = vector.load %arg2[%c17, %c0_94] : memref<25x32xf32, #tpu.memory_space<vmem>>, vector<1x32xf32>
    %133 = vector.shape_cast %132 : vector<1x32xf32> to vector<32xf32>
    %134 = vector.shape_cast %133 : vector<32xf32> to vector<1x1x32xf32>
    %135 = vector.broadcast %134 : vector<1x1x32xf32> to vector<8x8x32xf32>
    %136 = arith.mulf %131, %135 : vector<8x8x32xf32>
    %137 = arith.addf %130, %136 : vector<8x8x32xf32>
    %c3_95 = arith.constant 3 : index
    %c9_96 = arith.constant 9 : index
    %c0_97 = arith.constant 0 : index
    %138 = vector.load %arg5[%c3_95, %c9_96, %c0_97] : memref<12x24x32xf32, #tpu.memory_space<vmem>>, vector<8x8x32xf32>
    %c18 = arith.constant 18 : index
    %c0_98 = arith.constant 0 : index
    %139 = vector.load %arg2[%c18, %c0_98] : memref<25x32xf32, #tpu.memory_space<vmem>>, vector<1x32xf32>
    %140 = vector.shape_cast %139 : vector<1x32xf32> to vector<32xf32>
    %141 = vector.shape_cast %140 : vector<32xf32> to vector<1x1x32xf32>
    %142 = vector.broadcast %141 : vector<1x1x32xf32> to vector<8x8x32xf32>
    %143 = arith.mulf %138, %142 : vector<8x8x32xf32>
    %144 = arith.addf %137, %143 : vector<8x8x32xf32>
    %c3_99 = arith.constant 3 : index
    %c10_100 = arith.constant 10 : index
    %c0_101 = arith.constant 0 : index
    %145 = vector.load %arg5[%c3_99, %c10_100, %c0_101] : memref<12x24x32xf32, #tpu.memory_space<vmem>>, vector<8x8x32xf32>
    %c19 = arith.constant 19 : index
    %c0_102 = arith.constant 0 : index
    %146 = vector.load %arg2[%c19, %c0_102] : memref<25x32xf32, #tpu.memory_space<vmem>>, vector<1x32xf32>
    %147 = vector.shape_cast %146 : vector<1x32xf32> to vector<32xf32>
    %148 = vector.shape_cast %147 : vector<32xf32> to vector<1x1x32xf32>
    %149 = vector.broadcast %148 : vector<1x1x32xf32> to vector<8x8x32xf32>
    %150 = arith.mulf %145, %149 : vector<8x8x32xf32>
    %151 = arith.addf %144, %150 : vector<8x8x32xf32>
    %c4_103 = arith.constant 4 : index
    %c6_104 = arith.constant 6 : index
    %c0_105 = arith.constant 0 : index
    %152 = vector.load %arg5[%c4_103, %c6_104, %c0_105] : memref<12x24x32xf32, #tpu.memory_space<vmem>>, vector<8x8x32xf32>
    %c20 = arith.constant 20 : index
    %c0_106 = arith.constant 0 : index
    %153 = vector.load %arg2[%c20, %c0_106] : memref<25x32xf32, #tpu.memory_space<vmem>>, vector<1x32xf32>
    %154 = vector.shape_cast %153 : vector<1x32xf32> to vector<32xf32>
    %155 = vector.shape_cast %154 : vector<32xf32> to vector<1x1x32xf32>
    %156 = vector.broadcast %155 : vector<1x1x32xf32> to vector<8x8x32xf32>
    %157 = arith.mulf %152, %156 : vector<8x8x32xf32>
    %158 = arith.addf %151, %157 : vector<8x8x32xf32>
    %c4_107 = arith.constant 4 : index
    %c7_108 = arith.constant 7 : index
    %c0_109 = arith.constant 0 : index
    %159 = vector.load %arg5[%c4_107, %c7_108, %c0_109] : memref<12x24x32xf32, #tpu.memory_space<vmem>>, vector<8x8x32xf32>
    %c21 = arith.constant 21 : index
    %c0_110 = arith.constant 0 : index
    %160 = vector.load %arg2[%c21, %c0_110] : memref<25x32xf32, #tpu.memory_space<vmem>>, vector<1x32xf32>
    %161 = vector.shape_cast %160 : vector<1x32xf32> to vector<32xf32>
    %162 = vector.shape_cast %161 : vector<32xf32> to vector<1x1x32xf32>
    %163 = vector.broadcast %162 : vector<1x1x32xf32> to vector<8x8x32xf32>
    %164 = arith.mulf %159, %163 : vector<8x8x32xf32>
    %165 = arith.addf %158, %164 : vector<8x8x32xf32>
    %c4_111 = arith.constant 4 : index
    %c8_112 = arith.constant 8 : index
    %c0_113 = arith.constant 0 : index
    %166 = vector.load %arg5[%c4_111, %c8_112, %c0_113] : memref<12x24x32xf32, #tpu.memory_space<vmem>>, vector<8x8x32xf32>
    %c22 = arith.constant 22 : index
    %c0_114 = arith.constant 0 : index
    %167 = vector.load %arg2[%c22, %c0_114] : memref<25x32xf32, #tpu.memory_space<vmem>>, vector<1x32xf32>
    %168 = vector.shape_cast %167 : vector<1x32xf32> to vector<32xf32>
    %169 = vector.shape_cast %168 : vector<32xf32> to vector<1x1x32xf32>
    %170 = vector.broadcast %169 : vector<1x1x32xf32> to vector<8x8x32xf32>
    %171 = arith.mulf %166, %170 : vector<8x8x32xf32>
    %172 = arith.addf %165, %171 : vector<8x8x32xf32>
    %c4_115 = arith.constant 4 : index
    %c9_116 = arith.constant 9 : index
    %c0_117 = arith.constant 0 : index
    %173 = vector.load %arg5[%c4_115, %c9_116, %c0_117] : memref<12x24x32xf32, #tpu.memory_space<vmem>>, vector<8x8x32xf32>
    %c23 = arith.constant 23 : index
    %c0_118 = arith.constant 0 : index
    %174 = vector.load %arg2[%c23, %c0_118] : memref<25x32xf32, #tpu.memory_space<vmem>>, vector<1x32xf32>
    %175 = vector.shape_cast %174 : vector<1x32xf32> to vector<32xf32>
    %176 = vector.shape_cast %175 : vector<32xf32> to vector<1x1x32xf32>
    %177 = vector.broadcast %176 : vector<1x1x32xf32> to vector<8x8x32xf32>
    %178 = arith.mulf %173, %177 : vector<8x8x32xf32>
    %179 = arith.addf %172, %178 : vector<8x8x32xf32>
    %c4_119 = arith.constant 4 : index
    %c10_120 = arith.constant 10 : index
    %c0_121 = arith.constant 0 : index
    %180 = vector.load %arg5[%c4_119, %c10_120, %c0_121] : memref<12x24x32xf32, #tpu.memory_space<vmem>>, vector<8x8x32xf32>
    %c24 = arith.constant 24 : index
    %c0_122 = arith.constant 0 : index
    %181 = vector.load %arg2[%c24, %c0_122] : memref<25x32xf32, #tpu.memory_space<vmem>>, vector<1x32xf32>
    %182 = vector.shape_cast %181 : vector<1x32xf32> to vector<32xf32>
    %183 = vector.shape_cast %182 : vector<32xf32> to vector<1x1x32xf32>
    %184 = vector.broadcast %183 : vector<1x1x32xf32> to vector<8x8x32xf32>
    %185 = arith.mulf %180, %184 : vector<8x8x32xf32>
    %186 = arith.addf %179, %185 : vector<8x8x32xf32>
    %c0_123 = arith.constant 0 : index
    %c0_124 = arith.constant 0 : index
    %c0_125 = arith.constant 0 : index
    %c0_126 = arith.constant 0 : index
    %187 = vector.load %arg3[%c0_123, %c0_124, %c0_125, %c0_126] : memref<1x8x8x32xf32, #tpu.memory_space<vmem>>, vector<1x8x8x32xf32>
    %188 = vector.shape_cast %187 : vector<1x8x8x32xf32> to vector<8x8x32xf32>
    %189 = vector.shape_cast %186 : vector<8x8x32xf32> to vector<1x8x8x32xf32>
    tpu.vector_store %arg3[%c0_123, %c0_124, %c0_125, %c0_126], %189 {strides = array<i32>} : memref<1x8x8x32xf32, #tpu.memory_space<vmem>>, vector<1x8x8x32xf32>,
    %190 = tpu.transpose %186, [1, 0, 2] : vector<8x8x32xf32> -> vector<8x8x32xf32>
    %c0_127 = arith.constant 0 : index
    %c0_128 = arith.constant 0 : index
    %c0_129 = arith.constant 0 : index
    %c0_130 = arith.constant 0 : index
    %191 = vector.load %arg4[%c0_127, %c0_128, %c0_129, %c0_130] : memref<1x8x8x32xf32, #tpu.memory_space<vmem>>, vector<1x8x8x32xf32>
    %192 = vector.shape_cast %191 : vector<1x8x8x32xf32> to vector<8x8x32xf32>
    %193 = vector.shape_cast %190 : vector<8x8x32xf32> to vector<1x8x8x32xf32>
    tpu.vector_store %arg4[%c0_127, %c0_128, %c0_129, %c0_130], %193 {strides = array<i32>} : memref<1x8x8x32xf32, #tpu.memory_space<vmem>>, vector<1x8x8x32xf32>,
    return
  }
  func.func @transform_0(%arg0: i32) -> (i32, i32, i32, i32) {
    %c0_i32 = arith.constant 0 : i32
    %c0_i32_0 = arith.constant 0 : i32
    %c0_i32_1 = arith.constant 0 : i32
    %c0_i32_2 = arith.constant 0 : i32
    return %arg0, %c0_i32, %c0_i32_0, %c0_i32_1 : i32, i32, i32, i32
  }
  func.func @transform_1(%arg0: i32) -> (i32, i32) {
    %c0_i32 = arith.constant 0 : i32
    %c0_i32_0 = arith.constant 0 : i32
    %c0_i32_1 = arith.constant 0 : i32
    return %c0_i32, %c0_i32_0 : i32, i32
  }
  func.func @transform_2(%arg0: i32) -> (i32, i32, i32, i32) {
    %c0_i32 = arith.constant 0 : i32
    %c0_i32_0 = arith.constant 0 : i32
    %c0_i32_1 = arith.constant 0 : i32
    %c0_i32_2 = arith.constant 0 : i32
    return %arg0, %c0_i32, %c0_i32_0, %c0_i32_1 : i32, i32, i32, i32
  }
  func.func @transform_3(%arg0: i32) -> (i32, i32, i32, i32) {
    %c0_i32 = arith.constant 0 : i32
    %c0_i32_0 = arith.constant 0 : i32
    %c0_i32_1 = arith.constant 0 : i32
    %c0_i32_2 = arith.constant 0 : i32
    return %arg0, %c0_i32, %c0_i32_0, %c0_i32_1 : i32, i32, i32, i32
  }
}

</mosaic_0001>

<llo_original>
// kernel: tpu_custom_call.1
$region0: #{tpu_custom_call.1}
  #allocation0 [shape = 'u32[]', space=smem, size = 0x4, offset = 0x4, fixed_abs, tag = 'smem constant byte address 0x4 - core index']
  #allocation1 [shape = 'u32[144,128]{1,0:T(1,128)}', space=vmem, size = 0x12000, scoped, tag = 'internal scratch']
  #allocation2 [shape = 'f32[12,24,32]{2,1,0:T(8,128)}', space=vmem, size = 0x24000, scoped, tag = 'scratch operand']
  %s0 = inlined_call_operand.hbm [shape: f32[2,8,8,32], index: 0, kind: input, shape index: {}]
  %s1 = inlined_call_operand.hbm [shape: f32[25,32], index: 1, kind: input, shape index: {}]
  %s2 = inlined_call_operand.hbm [shape: f32[2,8,8,32], index: 2, kind: output, shape index: {0}]
  %s3 = inlined_call_operand.hbm [shape: f32[2,8,8,32], index: 3, kind: output, shape index: {1}]
  %4 = xla_tuple %s2, %s3
  %s5 = sld [smem:[#allocation0]]
  $region57: #{tpu_custom_call.1} parent=0
    _
  %s7 = ssub.s32 1, %s5
  %s8 = scalar_select 0, %s7, %s5
  $region1: #{tpu_custom_call.1} parent=0
    #allocation3 [shape = 'u8[65536]{0}', space=vmem, size = 0x10000, scoped, tag = 'input window, operand 0']
    #allocation4 [shape = 's32[2]{0}', space=sflag, size = 0x8, scoped, tag = 'scoped memory for tpu_custom_call.1']
    #allocation5 [shape = 's32[2]{0}', space=sflag, size = 0x8, scoped, tag = 'scoped memory for tpu_custom_call.1']
    #allocation6 [shape = 'u8[16384]{0}', space=vmem, size = 0x4000, scoped, tag = 'input window, operand 1, single buffered']
    #allocation7 [shape = 's32[1]{0}', space=sflag, size = 0x4, scoped, tag = 'scoped memory for tpu_custom_call.1']
    #allocation8 [shape = 'u8[65536]{0}', space=vmem, size = 0x10000, scoped, tag = 'output window, operand 0']
    #allocation9 [shape = 'u8[65536]{0}', space=vmem, size = 0x10000, scoped, tag = 'output window, operand 1']
    #allocation10 [shape = 's32[2]{0}', space=sflag, size = 0x8, scoped, tag = 'scoped memory for tpu_custom_call.1']
    %9 = vsyncpa [#allocation4], 0
    %s10 = scalar_lea.sflag [#allocation4], 1
    %11 = vsyncpa %s10, 0
    %12 = vsyncpa [#allocation7], 0
    %13 = vsyncpa [#allocation5], 0
    %s14 = scalar_lea.sflag [#allocation5], 1
    %15 = vsyncpa %s14, 0
    %16 = vsyncpa [#allocation10], 0
    %s17 = scalar_lea.sflag [#allocation10], 1
    %18 = vsyncpa %s17, 0
    loop: start=0, step=1, limit=4
    $region2: #{tpu_custom_call.1} parent=1 // loop_pre_header
      _
    $region3: #{tpu_custom_call.1} parent=1 // loop_header
      %s20 = sphi 0, %s24
      %p21 = scmp.ge.s32.totalorder %s20, 4
      %s30 = sphi 0, %s32
      %s33 = sphi 0, %s30
      %s34 = sphi 0, %s33
      %s50 = sphi 0, %s34
      %s54 = sphi 0, %s54
      %s56 = sphi 0, %s54
      %s57 = sphi 0, %s56
      %s71 = sphi 0, %s57
      %s77 = sphi 0, %s79
      %s80 = sphi 0, %s77
      %s81 = sphi 0, %s80
      %s97 = sphi 0, %s81
      %s103 = sphi 0, %s105
      %s106 = sphi 0, %s103
      %s107 = sphi 0, %s106
      %s123 = sphi 0, %s107
    $region4: #{tpu_custom_call.1} parent=1 // loop_header_branch
      %23 = sbr.rel (%p21) target = $region8
    $region5: #{tpu_custom_call.1} parent=1 // loop_body
      %s25 = ssub.s32 %s20, 1
      %s26 = ssub.s32 %s20, 2
      %s27 = sadd.s32 %s20, 1
      %s28 = ssub.s32 %s20, %s27
      %p29 = scmp.eq.s32.totalorder %s28, 0
      %s31 = sadd.s32 %s30, 1
      %s32 = scalar_select %p29, %s30, %s31
      %p35 = pneg %p29
      %p36 = scmp.eq.s32.totalorder %s20, 1
      %p37 = por %p35, %p36
      %p38 = scmp.ne.s32.totalorder %s30, %s33
      %p39 = scmp.eq.s32.totalorder %s20, 0
      %p40 = por %p38, %p39
      %p41 = scmp.ne.s32.totalorder %s30, %s33
      %p42 = scmp.eq.s32.totalorder %s25, 1
      %p43 = por %p41, %p42
      %p44 = scmp.ne.s32.totalorder %s33, %s34
      %p45 = scmp.eq.s32.totalorder %s25, 0
      %p46 = por %p44, %p45
      %p47 = scmp.ne.s32.totalorder %s33, %s34
      %p48 = scmp.eq.s32.totalorder %s26, 1
      %p49 = por %p47, %p48
      %p51 = scmp.ne.s32.totalorder %s34, %s50
      %p52 = scmp.eq.s32.totalorder %s26, 0
      %p53 = por %p51, %p52
      %s55 = sadd.s32 %s54, 1
      %p58 = scmp.eq.s32.totalorder %s20, 1
      %p59 = scmp.ne.s32.totalorder %s54, %s56
      %p60 = scmp.eq.s32.totalorder %s20, 0
      %p61 = por %p59, %p60
      %p62 = scmp.ne.s32.totalorder %s54, %s56
      %p63 = scmp.eq.s32.totalorder %s25, 1
      %p64 = por %p62, %p63
      %p65 = scmp.ne.s32.totalorder %s56, %s57
      %p66 = scmp.eq.s32.totalorder %s25, 0
      %p67 = por %p65, %p66
      %p68 = scmp.ne.s32.totalorder %s56, %s57
      %p69 = scmp.eq.s32.totalorder %s26, 1
      %p70 = por %p68, %p69
      %p72 = scmp.ne.s32.totalorder %s57, %s71
      %p73 = scmp.eq.s32.totalorder %s26, 0
      %p74 = por %p72, %p73
      %s75 = ssub.s32 %s20, %s27
      %p76 = scmp.eq.s32.totalorder %s75, 0
      %s78 = sadd.s32 %s77, 1
      %s79 = scalar_select %p76, %s77, %s78
      %p82 = pneg %p76
      %p83 = scmp.eq.s32.totalorder %s20, 1
      %p84 = por %p82, %p83
      %p85 = scmp.ne.s32.totalorder %s77, %s80
      %p86 = scmp.eq.s32.totalorder %s20, 0
      %p87 = por %p85, %p86
      %p88 = scmp.ne.s32.totalorder %s77, %s80
      %p89 = scmp.eq.s32.totalorder %s25, 1
      %p90 = por %p88, %p89
      %p91 = scmp.ne.s32.totalorder %s80, %s81
      %p92 = scmp.eq.s32.totalorder %s25, 0
      %p93 = por %p91, %p92
      %p94 = scmp.ne.s32.totalorder %s80, %s81
      %p95 = scmp.eq.s32.totalorder %s26, 1
      %p96 = por %p94, %p95
      %p98 = scmp.ne.s32.totalorder %s81, %s97
      %p99 = scmp.eq.s32.totalorder %s26, 0
      %p100 = por %p98, %p99
      %s101 = ssub.s32 %s20, %s27
      %p102 = scmp.eq.s32.totalorder %s101, 0
      %s104 = sadd.s32 %s103, 1
      %s105 = scalar_select %p102, %s103, %s104
      %p108 = pneg %p102
      %p109 = scmp.eq.s32.totalorder %s20, 1
      %p110 = por %p108, %p109
      %p111 = scmp.ne.s32.totalorder %s103, %s106
      %p112 = scmp.eq.s32.totalorder %s20, 0
      %p113 = por %p111, %p112
      %p114 = scmp.ne.s32.totalorder %s103, %s106
      %p115 = scmp.eq.s32.totalorder %s25, 1
      %p116 = por %p114, %p115
      %p117 = scmp.ne.s32.totalorder %s106, %s107
      %p118 = scmp.eq.s32.totalorder %s25, 0
      %p119 = por %p117, %p118
      %p120 = scmp.ne.s32.totalorder %s106, %s107
      %p121 = scmp.eq.s32.totalorder %s26, 1
      %p122 = por %p120, %p121
      %p124 = scmp.ne.s32.totalorder %s107, %s123
      %p125 = scmp.eq.s32.totalorder %s26, 0
      %p126 = por %p124, %p125
      %p127 = scmp.le.s32.totalorder 1, %s20
      %p128 = scmp.lt.s32.totalorder %s20, 3
      %p129 = pnand %p127, %p128
      %p130 = pneg %p129
      // Predicated region
      $region9: #{tpu_custom_call.1} parent=5 // pred_check
        _
      $region10: #{tpu_custom_call.1} parent=5 // pred_check_branch
        %132 = sbr.rel (%p129) target = $region12
      $region11: #{tpu_custom_call.1} parent=5 // pred_region
        %s133 = ssub.s32 %s20, 1
        // Predicated region
        $region13: #{tpu_custom_call.1} parent=11 // pred_check
          %p134 = pneg %p67
        $region14: #{tpu_custom_call.1} parent=11 // pred_check_branch
          %136 = sbr.rel (%p134) target = $region16
        $region15: #{tpu_custom_call.1} parent=11 // pred_region
          %s138 = ssub.s32 512, 512
          %139 = vsyncadd [#allocation7], %s138
          %s140 = sshll.u32 [#allocation6], 4
          %s141 = int_to_ptr.vmem [resolvable:$true] %s140
          %146 = dma.hbm_to_vmem [thread:$0]  %s1, 512, %s141, [#allocation7], 128, 128, 8
        $region16: #{tpu_custom_call.1} parent=11 // pred_fallthru
          _
      $region12: #{tpu_custom_call.1} parent=5 // pred_fallthru
        _
      %p147 = scmp.lt.s32.totalorder %s20, 2
      // Predicated region
      $region17: #{tpu_custom_call.1} parent=5 // pred_check
        %p148 = pneg %p147
      $region18: #{tpu_custom_call.1} parent=5 // pred_check_branch
        %150 = sbr.rel (%p148) target = $region20
      $region19: #{tpu_custom_call.1} parent=5 // pred_region
        // Predicated region
        $region21: #{tpu_custom_call.1} parent=19 // pred_check
          %p151 = pneg %p40
        $region22: #{tpu_custom_call.1} parent=19 // pred_check_branch
          %153 = sbr.rel (%p151) target = $region24
        $region23: #{tpu_custom_call.1} parent=19 // pred_region
          %s154 = sand.u32 %s30, 1
          %s155 = scalar_lea.sflag [#allocation4], %s154
          %s156 = sand.u32 %s30, 1
          %s157 = smul.addr %s156, 64
          %s158 = scalar_lea.vmem [#allocation3], %s157
          %s160 = ssub.s32 1024, 1024
          %161 = vsyncadd %s155, %s160
          %s162 = smul.addr %s20, 8
          %s163 = smul.addr %s162, 128
          %s164 = scalar_lea.hbm %s0, %s163
          %s165 = sshll.u32 %s158, 4
          %s166 = int_to_ptr.vmem [resolvable:$true] %s165
          %171 = dma.hbm_to_vmem [thread:$0]  %s164, 1024, %s166, %s155, 128, 128, 8
        $region24: #{tpu_custom_call.1} parent=19 // pred_fallthru
          _
      $region20: #{tpu_custom_call.1} parent=5 // pred_fallthru
        _
      %p172 = scmp.le.s32.totalorder 1, %s20
      %p173 = scmp.lt.s32.totalorder %s20, 3
      %p174 = pnand %p172, %p173
      %p175 = pneg %p174
      // Predicated region
      $region25: #{tpu_custom_call.1} parent=5 // pred_check
        _
      $region26: #{tpu_custom_call.1} parent=5 // pred_check_branch
        %177 = sbr.rel (%p174) target = $region28
      $region27: #{tpu_custom_call.1} parent=5 // pred_region
        %s178 = ssub.s32 %s20, 1
        %s179 = sand.u32 %s33, 1
        %s180 = scalar_lea.sflag [#allocation4], %s179
        %s181 = sand.u32 %s33, 1
        %s182 = smul.addr %s181, 64
        %s183 = scalar_lea.vmem [#allocation3], %s182
        // Predicated region
        $region29: #{tpu_custom_call.1} parent=27 // pred_check
          %p184 = pneg %p46
        $region30: #{tpu_custom_call.1} parent=27 // pred_check_branch
          %186 = sbr.rel (%p184) target = $region32
        $region31: #{tpu_custom_call.1} parent=27 // pred_region
          %187 = dma.done %s180, 1024
        $region32: #{tpu_custom_call.1} parent=27 // pred_fallthru
          _
        // Predicated region
        $region33: #{tpu_custom_call.1} parent=27 // pred_check
          %p188 = pneg %p67
        $region34: #{tpu_custom_call.1} parent=27 // pred_check_branch
          %190 = sbr.rel (%p188) target = $region36
        $region35: #{tpu_custom_call.1} parent=27 // pred_region
          %191 = dma.done [#allocation7], 512
        $region36: #{tpu_custom_call.1} parent=27 // pred_fallthru
          _
        %s192 = sand.u32 %s33, 1
        %s193 = scalar_lea.sflag [#allocation4], %s192
        %s194 = sand.u32 %s33, 1
        %s195 = smul.addr %s194, 64
        %s196 = scalar_lea.vmem [#allocation3], %s195
        %p197 = pneg %p46
        %p198 = pneg %p43
        %p199 = pneg %p67
        %p200 = pneg %p64
        %p201 = pneg %p93
        %p202 = pneg %p90
        %s203 = sand.u32 %s80, 1
        %s204 = scalar_lea.sflag [#allocation5], %s203
        %s205 = sand.u32 %s80, 1
        %s206 = smul.addr %s205, 64
        %s207 = scalar_lea.vmem [#allocation8], %s206
        %p208 = pneg %p119
        %p209 = pneg %p116
        %s210 = sand.u32 %s106, 1
        %s211 = scalar_lea.sflag [#allocation10], %s210
        %s212 = sand.u32 %s106, 1
        %s213 = smul.addr %s212, 64
        %s214 = scalar_lea.vmem [#allocation9], %s213
        %vm215 = vcmask 261120
        %216 = vst.msk [vmem:[#allocation2] sm:$0xff] %vm215, 0.0
        %217 = vst.msk [vmem:[#allocation2 + $0x8] sm:$0xff] %vm215, 0.0
        %218 = vst.msk [vmem:[#allocation2 + $0x10] sm:$0xff] %vm215, 0.0
        %219 = vst.msk [vmem:[#allocation2 + $0x18] sm:$0xff] %vm215, 0.0
        %220 = vst.msk [vmem:[#allocation2 + $0x20] sm:$0xff] %vm215, 0.0
        %221 = vst.msk [vmem:[#allocation2 + $0x28] sm:$0xff] %vm215, 0.0
        %s222 = scalar_lea.vmem [#allocation2], 240
        %223 = vst.msk [vmem:[%s222] sm:$0xff] %vm215, 0.0
        %224 = vst.msk [vmem:[%s222 + $0x8] sm:$0xff] %vm215, 0.0
        %225 = vst.msk [vmem:[%s222 + $0x10] sm:$0xff] %vm215, 0.0
        %226 = vst.msk [vmem:[%s222 + $0x18] sm:$0xff] %vm215, 0.0
        %227 = vst.msk [vmem:[%s222 + $0x20] sm:$0xff] %vm215, 0.0
        %228 = vst.msk [vmem:[%s222 + $0x28] sm:$0xff] %vm215, 0.0
        %s229 = scalar_lea.vmem [#allocation2], 48
        %230 = vst.msk [vmem:[%s229] sm:$0xff] %vm215, 0.0
        %231 = vst.msk [vmem:[%s229 + $0x18] sm:$0xff] %vm215, 0.0
        %232 = vst.msk [vmem:[%s229 + $0x30] sm:$0xff] %vm215, 0.0
        %233 = vst.msk [vmem:[%s229 + $0x48] sm:$0xff] %vm215, 0.0
        %234 = vst.msk [vmem:[%s229 + $0x60] sm:$0xff] %vm215, 0.0
        %235 = vst.msk [vmem:[%s229 + $0x78] sm:$0xff] %vm215, 0.0
        %236 = vst.msk [vmem:[%s229 + $0x90] sm:$0xff] %vm215, 0.0
        %237 = vst.msk [vmem:[%s229 + $0xa8] sm:$0xff] %vm215, 0.0
        %238 = vst.msk [vmem:[%s229 + $0x10] sm:$0xff] %vm215, 0.0
        %239 = vst.msk [vmem:[%s229 + $0x28] sm:$0xff] %vm215, 0.0
        %240 = vst.msk [vmem:[%s229 + $0x40] sm:$0xff] %vm215, 0.0
        %241 = vst.msk [vmem:[%s229 + $0x58] sm:$0xff] %vm215, 0.0
        %242 = vst.msk [vmem:[%s229 + $0x70] sm:$0xff] %vm215, 0.0
        %243 = vst.msk [vmem:[%s229 + $0x88] sm:$0xff] %vm215, 0.0
        %244 = vst.msk [vmem:[%s229 + $0xa0] sm:$0xff] %vm215, 0.0
        %245 = vst.msk [vmem:[%s229 + $0xb8] sm:$0xff] %vm215, 0.0
        %v246 = vld [vmem:[%s183] sm:$0xff]
        %v247 = vld [vmem:[%s183 + $0x8] sm:$0xff]
        %v248 = vld [vmem:[%s183 + $0x10] sm:$0xff]
        %v249 = vld [vmem:[%s183 + $0x18] sm:$0xff]
        %v250 = vld [vmem:[%s183 + $0x20] sm:$0xff]
        %v251 = vld [vmem:[%s183 + $0x28] sm:$0xff]
        %v252 = vld [vmem:[%s183 + $0x30] sm:$0xff]
        %v253 = vld [vmem:[%s183 + $0x38] sm:$0xff]
        %254 = vst.msk [vmem:[%s229 + $0x8] sm:$0xff] %vm215, %v246
        %255 = vst.msk [vmem:[%s229 + $0x20] sm:$0xff] %vm215, %v247
        %256 = vst.msk [vmem:[%s229 + $0x38] sm:$0xff] %vm215, %v248
        %257 = vst.msk [vmem:[%s229 + $0x50] sm:$0xff] %vm215, %v249
        %258 = vst.msk [vmem:[%s229 + $0x68] sm:$0xff] %vm215, %v250
        %259 = vst.msk [vmem:[%s229 + $0x80] sm:$0xff] %vm215, %v251
        %260 = vst.msk [vmem:[%s229 + $0x98] sm:$0xff] %vm215, %v252
        %261 = vst.msk [vmem:[%s229 + $0xb0] sm:$0xff] %vm215, %v253
        %v262 = vld [vmem:[#allocation2 + $0x6] sm:$0xff]
        %v263 = vld [vmem:[#allocation2 + $0x1e] sm:$0xff]
        %v264 = vld [vmem:[#allocation2 + $0x36] sm:$0xff]
        %v265 = vld [vmem:[#allocation2 + $0x4e] sm:$0xff]
        %v266 = vld [vmem:[#allocation2 + $0x66] sm:$0xff]
        %v267 = vld [vmem:[#allocation2 + $0x7e] sm:$0xff]
        %v268 = vld [vmem:[#allocation2 + $0x96] sm:$0xff]
        %v269 = vld [vmem:[#allocation2 + $0xae] sm:$0xff]
        %v270 = vld [vmem:[#allocation6] sm:$0x1]
        %v271 = vlaneseq
        %v272 = vshrl.u32 %v271, 7
        %v273 = vsub.s32 0, %v272
        %v274 = vrot.slane %v270, %v273
        %v275 = vmul.f32 %v262, %v274
        %v276 = vmul.f32 %v263, %v274
        %v277 = vmul.f32 %v264, %v274
        %v278 = vmul.f32 %v265, %v274
        %v279 = vmul.f32 %v266, %v274
        %v280 = vmul.f32 %v267, %v274
        %v281 = vmul.f32 %v268, %v274
        %v282 = vmul.f32 %v269, %v274
        %v283 = vadd.f32 %v275, 0.0
        %v284 = vadd.f32 %v276, 0.0
        %v285 = vadd.f32 %v277, 0.0
        %v286 = vadd.f32 %v278, 0.0
        %v287 = vadd.f32 %v279, 0.0
        %v288 = vadd.f32 %v280, 0.0
        %v289 = vadd.f32 %v281, 0.0
        %v290 = vadd.f32 %v282, 0.0
        %v291 = vld [vmem:[#allocation2 + $0x7] sm:$0xff]
        %v292 = vld [vmem:[#allocation2 + $0x1f] sm:$0xff]
        %v293 = vld [vmem:[#allocation2 + $0x37] sm:$0xff]
        %v294 = vld [vmem:[#allocation2 + $0x4f] sm:$0xff]
        %v295 = vld [vmem:[#allocation2 + $0x67] sm:$0xff]
        %v296 = vld [vmem:[#allocation2 + $0x7f] sm:$0xff]
        %v297 = vld [vmem:[#allocation2 + $0x97] sm:$0xff]
        %v298 = vld [vmem:[#allocation2 + $0xaf] sm:$0xff]
        %v299 = vld [vmem:[#allocation6 + $0x1] sm:$0x1]
        %v300 = vlaneseq
        %v301 = vshrl.u32 %v300, 7
        %v302 = vsub.s32 0, %v301
        %v303 = vrot.slane %v299, %v302
        %v304 = vmul.f32 %v291, %v303
        %v305 = vmul.f32 %v292, %v303
        %v306 = vmul.f32 %v293, %v303
        %v307 = vmul.f32 %v294, %v303
        %v308 = vmul.f32 %v295, %v303
        %v309 = vmul.f32 %v296, %v303
        %v310 = vmul.f32 %v297, %v303
        %v311 = vmul.f32 %v298, %v303
        %v312 = vadd.f32 %v283, %v304
        %v313 = vadd.f32 %v284, %v305
        %v314 = vadd.f32 %v285, %v306
        %v315 = vadd.f32 %v286, %v307
        %v316 = vadd.f32 %v287, %v308
        %v317 = vadd.f32 %v288, %v309
        %v318 = vadd.f32 %v289, %v310
        %v319 = vadd.f32 %v290, %v311
        %v320 = vld [vmem:[#allocation2 + $0x8] sm:$0xff]
        %v321 = vld [vmem:[#allocation2 + $0x20] sm:$0xff]
        %v322 = vld [vmem:[#allocation2 + $0x38] sm:$0xff]
        %v323 = vld [vmem:[#allocation2 + $0x50] sm:$0xff]
        %v324 = vld [vmem:[#allocation2 + $0x68] sm:$0xff]
        %v325 = vld [vmem:[#allocation2 + $0x80] sm:$0xff]
        %v326 = vld [vmem:[#allocation2 + $0x98] sm:$0xff]
        %v327 = vld [vmem:[#allocation2 + $0xb0] sm:$0xff]
        %v328 = vld [vmem:[#allocation6 + $0x2] sm:$0x1]
        %v329 = vlaneseq
        %v330 = vshrl.u32 %v329, 7
        %v331 = vsub.s32 0, %v330
        %v332 = vrot.slane %v328, %v331
        %v333 = vmul.f32 %v320, %v332
        %v334 = vmul.f32 %v321, %v332
        %v335 = vmul.f32 %v322, %v332
        %v336 = vmul.f32 %v323, %v332
        %v337 = vmul.f32 %v324, %v332
        %v338 = vmul.f32 %v325, %v332
        %v339 = vmul.f32 %v326, %v332
        %v340 = vmul.f32 %v327, %v332
        %v341 = vadd.f32 %v312, %v333
        %v342 = vadd.f32 %v313, %v334
        %v343 = vadd.f32 %v314, %v335
        %v344 = vadd.f32 %v315, %v336
        %v345 = vadd.f32 %v316, %v337
        %v346 = vadd.f32 %v317, %v338
        %v347 = vadd.f32 %v318, %v339
        %v348 = vadd.f32 %v319, %v340
        %v349 = vld [vmem:[#allocation2 + $0x9] sm:$0xff]
        %v350 = vld [vmem:[#allocation2 + $0x21] sm:$0xff]
        %v351 = vld [vmem:[#allocation2 + $0x39] sm:$0xff]
        %v352 = vld [vmem:[#allocation2 + $0x51] sm:$0xff]
        %v353 = vld [vmem:[#allocation2 + $0x69] sm:$0xff]
        %v354 = vld [vmem:[#allocation2 + $0x81] sm:$0xff]
        %v355 = vld [vmem:[#allocation2 + $0x99] sm:$0xff]
        %v356 = vld [vmem:[#allocation2 + $0xb1] sm:$0xff]
        %v357 = vld [vmem:[#allocation6 + $0x3] sm:$0x1]
        %v358 = vlaneseq
        %v359 = vshrl.u32 %v358, 7
        %v360 = vsub.s32 0, %v359
        %v361 = vrot.slane %v357, %v360
        %v362 = vmul.f32 %v349, %v361
        %v363 = vmul.f32 %v350, %v361
        %v364 = vmul.f32 %v351, %v361
        %v365 = vmul.f32 %v352, %v361
        %v366 = vmul.f32 %v353, %v361
        %v367 = vmul.f32 %v354, %v361
        %v368 = vmul.f32 %v355, %v361
        %v369 = vmul.f32 %v356, %v361
        %v370 = vadd.f32 %v341, %v362
        %v371 = vadd.f32 %v342, %v363
        %v372 = vadd.f32 %v343, %v364
        %v373 = vadd.f32 %v344, %v365
        %v374 = vadd.f32 %v345, %v366
        %v375 = vadd.f32 %v346, %v367
        %v376 = vadd.f32 %v347, %v368
        %v377 = vadd.f32 %v348, %v369
        %v378 = vld [vmem:[#allocation2 + $0xa] sm:$0xff]
        %v379 = vld [vmem:[#allocation2 + $0x22] sm:$0xff]
        %v380 = vld [vmem:[#allocation2 + $0x3a] sm:$0xff]
        %v381 = vld [vmem:[#allocation2 + $0x52] sm:$0xff]
        %v382 = vld [vmem:[#allocation2 + $0x6a] sm:$0xff]
        %v383 = vld [vmem:[#allocation2 + $0x82] sm:$0xff]
        %v384 = vld [vmem:[#allocation2 + $0x9a] sm:$0xff]
        %v385 = vld [vmem:[#allocation2 + $0xb2] sm:$0xff]
        %v386 = vld [vmem:[#allocation6 + $0x4] sm:$0x1]
        %v387 = vlaneseq
        %v388 = vshrl.u32 %v387, 7
        %v389 = vsub.s32 0, %v388
        %v390 = vrot.slane %v386, %v389
        %v391 = vmul.f32 %v378, %v390
        %v392 = vmul.f32 %v379, %v390
        %v393 = vmul.f32 %v380, %v390
        %v394 = vmul.f32 %v381, %v390
        %v395 = vmul.f32 %v382, %v390
        %v396 = vmul.f32 %v383, %v390
        %v397 = vmul.f32 %v384, %v390
        %v398 = vmul.f32 %v385, %v390
        %v399 = vadd.f32 %v370, %v391
        %v400 = vadd.f32 %v371, %v392
        %v401 = vadd.f32 %v372, %v393
        %v402 = vadd.f32 %v373, %v394
        %v403 = vadd.f32 %v374, %v395
        %v404 = vadd.f32 %v375, %v396
        %v405 = vadd.f32 %v376, %v397
        %v406 = vadd.f32 %v377, %v398
        %s407 = scalar_lea.vmem [#allocation2], 24
        %v408 = vld [vmem:[%s407 + $0x6] sm:$0xff]
        %v409 = vld [vmem:[%s407 + $0x1e] sm:$0xff]
        %v410 = vld [vmem:[%s407 + $0x36] sm:$0xff]
        %v411 = vld [vmem:[%s407 + $0x4e] sm:$0xff]
        %v412 = vld [vmem:[%s407 + $0x66] sm:$0xff]
        %v413 = vld [vmem:[%s407 + $0x7e] sm:$0xff]
        %v414 = vld [vmem:[%s407 + $0x96] sm:$0xff]
        %v415 = vld [vmem:[%s407 + $0xae] sm:$0xff]
        %v416 = vld [vmem:[#allocation6 + $0x5] sm:$0x1]
        %v417 = vlaneseq
        %v418 = vshrl.u32 %v417, 7
        %v419 = vsub.s32 0, %v418
        %v420 = vrot.slane %v416, %v419
        %v421 = vmul.f32 %v408, %v420
        %v422 = vmul.f32 %v409, %v420
        %v423 = vmul.f32 %v410, %v420
        %v424 = vmul.f32 %v411, %v420
        %v425 = vmul.f32 %v412, %v420
        %v426 = vmul.f32 %v413, %v420
        %v427 = vmul.f32 %v414, %v420
        %v428 = vmul.f32 %v415, %v420
        %v429 = vadd.f32 %v399, %v421
        %v430 = vadd.f32 %v400, %v422
        %v431 = vadd.f32 %v401, %v423
        %v432 = vadd.f32 %v402, %v424
        %v433 = vadd.f32 %v403, %v425
        %v434 = vadd.f32 %v404, %v426
        %v435 = vadd.f32 %v405, %v427
        %v436 = vadd.f32 %v406, %v428
        %v437 = vld [vmem:[%s407 + $0x7] sm:$0xff]
        %v438 = vld [vmem:[%s407 + $0x1f] sm:$0xff]
        %v439 = vld [vmem:[%s407 + $0x37] sm:$0xff]
        %v440 = vld [vmem:[%s407 + $0x4f] sm:$0xff]
        %v441 = vld [vmem:[%s407 + $0x67] sm:$0xff]
        %v442 = vld [vmem:[%s407 + $0x7f] sm:$0xff]
        %v443 = vld [vmem:[%s407 + $0x97] sm:$0xff]
        %v444 = vld [vmem:[%s407 + $0xaf] sm:$0xff]
        %v445 = vld [vmem:[#allocation6 + $0x6] sm:$0x1]
        %v446 = vlaneseq
        %v447 = vshrl.u32 %v446, 7
        %v448 = vsub.s32 0, %v447
        %v449 = vrot.slane %v445, %v448
        %v450 = vmul.f32 %v437, %v449
        %v451 = vmul.f32 %v438, %v449
        %v452 = vmul.f32 %v439, %v449
        %v453 = vmul.f32 %v440, %v449
        %v454 = vmul.f32 %v441, %v449
        %v455 = vmul.f32 %v442, %v449
        %v456 = vmul.f32 %v443, %v449
        %v457 = vmul.f32 %v444, %v449
        %v458 = vadd.f32 %v429, %v450
        %v459 = vadd.f32 %v430, %v451
        %v460 = vadd.f32 %v431, %v452
        %v461 = vadd.f32 %v432, %v453
        %v462 = vadd.f32 %v433, %v454
        %v463 = vadd.f32 %v434, %v455
        %v464 = vadd.f32 %v435, %v456
        %v465 = vadd.f32 %v436, %v457
        %v466 = vld [vmem:[%s407 + $0x8] sm:$0xff]
        %v467 = vld [vmem:[%s407 + $0x20] sm:$0xff]
        %v468 = vld [vmem:[%s407 + $0x38] sm:$0xff]
        %v469 = vld [vmem:[%s407 + $0x50] sm:$0xff]
        %v470 = vld [vmem:[%s407 + $0x68] sm:$0xff]
        %v471 = vld [vmem:[%s407 + $0x80] sm:$0xff]
        %v472 = vld [vmem:[%s407 + $0x98] sm:$0xff]
        %v473 = vld [vmem:[%s407 + $0xb0] sm:$0xff]
        %v474 = vld [vmem:[#allocation6 + $0x7] sm:$0x1]
        %v475 = vlaneseq
        %v476 = vshrl.u32 %v475, 7
        %v477 = vsub.s32 0, %v476
        %v478 = vrot.slane %v474, %v477
        %v479 = vmul.f32 %v466, %v478
        %v480 = vmul.f32 %v467, %v478
        %v481 = vmul.f32 %v468, %v478
        %v482 = vmul.f32 %v469, %v478
        %v483 = vmul.f32 %v470, %v478
        %v484 = vmul.f32 %v471, %v478
        %v485 = vmul.f32 %v472, %v478
        %v486 = vmul.f32 %v473, %v478
        %v487 = vadd.f32 %v458, %v479
        %v488 = vadd.f32 %v459, %v480
        %v489 = vadd.f32 %v460, %v481
        %v490 = vadd.f32 %v461, %v482
        %v491 = vadd.f32 %v462, %v483
        %v492 = vadd.f32 %v463, %v484
        %v493 = vadd.f32 %v464, %v485
        %v494 = vadd.f32 %v465, %v486
        %v495 = vld [vmem:[%s407 + $0x9] sm:$0xff]
        %v496 = vld [vmem:[%s407 + $0x21] sm:$0xff]
        %v497 = vld [vmem:[%s407 + $0x39] sm:$0xff]
        %v498 = vld [vmem:[%s407 + $0x51] sm:$0xff]
        %v499 = vld [vmem:[%s407 + $0x69] sm:$0xff]
        %v500 = vld [vmem:[%s407 + $0x81] sm:$0xff]
        %v501 = vld [vmem:[%s407 + $0x99] sm:$0xff]
        %v502 = vld [vmem:[%s407 + $0xb1] sm:$0xff]
        %v503 = vld [vmem:[#allocation6 + $0x8] sm:$0x1]
        %v504 = vlaneseq
        %v505 = vshrl.u32 %v504, 7
        %v506 = vsub.s32 0, %v505
        %v507 = vrot.slane %v503, %v506
        %v508 = vmul.f32 %v495, %v507
        %v509 = vmul.f32 %v496, %v507
        %v510 = vmul.f32 %v497, %v507
        %v511 = vmul.f32 %v498, %v507
        %v512 = vmul.f32 %v499, %v507
        %v513 = vmul.f32 %v500, %v507
        %v514 = vmul.f32 %v501, %v507
        %v515 = vmul.f32 %v502, %v507
        %v516 = vadd.f32 %v487, %v508
        %v517 = vadd.f32 %v488, %v509
        %v518 = vadd.f32 %v489, %v510
        %v519 = vadd.f32 %v490, %v511
        %v520 = vadd.f32 %v491, %v512
        %v521 = vadd.f32 %v492, %v513
        %v522 = vadd.f32 %v493, %v514
        %v523 = vadd.f32 %v494, %v515
        %v524 = vld [vmem:[%s407 + $0xa] sm:$0xff]
        %v525 = vld [vmem:[%s407 + $0x22] sm:$0xff]
        %v526 = vld [vmem:[%s407 + $0x3a] sm:$0xff]
        %v527 = vld [vmem:[%s407 + $0x52] sm:$0xff]
        %v528 = vld [vmem:[%s407 + $0x6a] sm:$0xff]
        %v529 = vld [vmem:[%s407 + $0x82] sm:$0xff]
        %v530 = vld [vmem:[%s407 + $0x9a] sm:$0xff]
        %v531 = vld [vmem:[%s407 + $0xb2] sm:$0xff]
        %v532 = vld [vmem:[#allocation6 + $0x9] sm:$0x1]
        %v533 = vlaneseq
        %v534 = vshrl.u32 %v533, 7
        %v535 = vsub.s32 0, %v534
        %v536 = vrot.slane %v532, %v535
        %v537 = vmul.f32 %v524, %v536
        %v538 = vmul.f32 %v525, %v536
        %v539 = vmul.f32 %v526, %v536
        %v540 = vmul.f32 %v527, %v536
        %v541 = vmul.f32 %v528, %v536
        %v542 = vmul.f32 %v529, %v536
        %v543 = vmul.f32 %v530, %v536
        %v544 = vmul.f32 %v531, %v536
        %v545 = vadd.f32 %v516, %v537
        %v546 = vadd.f32 %v517, %v538
        %v547 = vadd.f32 %v518, %v539
        %v548 = vadd.f32 %v519, %v540
        %v549 = vadd.f32 %v520, %v541
        %v550 = vadd.f32 %v521, %v542
        %v551 = vadd.f32 %v522, %v543
        %v552 = vadd.f32 %v523, %v544
        %v553 = vld [vmem:[%s229 + $0x6] sm:$0xff]
        %v554 = vld [vmem:[%s229 + $0x1e] sm:$0xff]
        %v555 = vld [vmem:[%s229 + $0x36] sm:$0xff]
        %v556 = vld [vmem:[%s229 + $0x4e] sm:$0xff]
        %v557 = vld [vmem:[%s229 + $0x66] sm:$0xff]
        %v558 = vld [vmem:[%s229 + $0x7e] sm:$0xff]
        %v559 = vld [vmem:[%s229 + $0x96] sm:$0xff]
        %v560 = vld [vmem:[%s229 + $0xae] sm:$0xff]
        %v561 = vld [vmem:[#allocation6 + $0xa] sm:$0x1]
        %v562 = vlaneseq
        %v563 = vshrl.u32 %v562, 7
        %v564 = vsub.s32 0, %v563
        %v565 = vrot.slane %v561, %v564
        %v566 = vmul.f32 %v553, %v565
        %v567 = vmul.f32 %v554, %v565
        %v568 = vmul.f32 %v555, %v565
        %v569 = vmul.f32 %v556, %v565
        %v570 = vmul.f32 %v557, %v565
        %v571 = vmul.f32 %v558, %v565
        %v572 = vmul.f32 %v559, %v565
        %v573 = vmul.f32 %v560, %v565
        %v574 = vadd.f32 %v545, %v566
        %v575 = vadd.f32 %v546, %v567
        %v576 = vadd.f32 %v547, %v568
        %v577 = vadd.f32 %v548, %v569
        %v578 = vadd.f32 %v549, %v570
        %v579 = vadd.f32 %v550, %v571
        %v580 = vadd.f32 %v551, %v572
        %v581 = vadd.f32 %v552, %v573
        %v582 = vld [vmem:[%s229 + $0x7] sm:$0xff]
        %v583 = vld [vmem:[%s229 + $0x1f] sm:$0xff]
        %v584 = vld [vmem:[%s229 + $0x37] sm:$0xff]
        %v585 = vld [vmem:[%s229 + $0x4f] sm:$0xff]
        %v586 = vld [vmem:[%s229 + $0x67] sm:$0xff]
        %v587 = vld [vmem:[%s229 + $0x7f] sm:$0xff]
        %v588 = vld [vmem:[%s229 + $0x97] sm:$0xff]
        %v589 = vld [vmem:[%s229 + $0xaf] sm:$0xff]
        %v590 = vld [vmem:[#allocation6 + $0xb] sm:$0x1]
        %v591 = vlaneseq
        %v592 = vshrl.u32 %v591, 7
        %v593 = vsub.s32 0, %v592
        %v594 = vrot.slane %v590, %v593
        %v595 = vmul.f32 %v582, %v594
        %v596 = vmul.f32 %v583, %v594
        %v597 = vmul.f32 %v584, %v594
        %v598 = vmul.f32 %v585, %v594
        %v599 = vmul.f32 %v586, %v594
        %v600 = vmul.f32 %v587, %v594
        %v601 = vmul.f32 %v588, %v594
        %v602 = vmul.f32 %v589, %v594
        %v603 = vadd.f32 %v574, %v595
        %v604 = vadd.f32 %v575, %v596
        %v605 = vadd.f32 %v576, %v597
        %v606 = vadd.f32 %v577, %v598
        %v607 = vadd.f32 %v578, %v599
        %v608 = vadd.f32 %v579, %v600
        %v609 = vadd.f32 %v580, %v601
        %v610 = vadd.f32 %v581, %v602
        %v611 = vld [vmem:[%s229 + $0x8] sm:$0xff]
        %v612 = vld [vmem:[%s229 + $0x20] sm:$0xff]
        %v613 = vld [vmem:[%s229 + $0x38] sm:$0xff]
        %v614 = vld [vmem:[%s229 + $0x50] sm:$0xff]
        %v615 = vld [vmem:[%s229 + $0x68] sm:$0xff]
        %v616 = vld [vmem:[%s229 + $0x80] sm:$0xff]
        %v617 = vld [vmem:[%s229 + $0x98] sm:$0xff]
        %v618 = vld [vmem:[%s229 + $0xb0] sm:$0xff]
        %v619 = vld [vmem:[#allocation6 + $0xc] sm:$0x1]
        %v620 = vlaneseq
        %v621 = vshrl.u32 %v620, 7
        %v622 = vsub.s32 0, %v621
        %v623 = vrot.slane %v619, %v622
        %v624 = vmul.f32 %v611, %v623
        %v625 = vmul.f32 %v612, %v623
        %v626 = vmul.f32 %v613, %v623
        %v627 = vmul.f32 %v614, %v623
        %v628 = vmul.f32 %v615, %v623
        %v629 = vmul.f32 %v616, %v623
        %v630 = vmul.f32 %v617, %v623
        %v631 = vmul.f32 %v618, %v623
        %v632 = vadd.f32 %v603, %v624
        %v633 = vadd.f32 %v604, %v625
        %v634 = vadd.f32 %v605, %v626
        %v635 = vadd.f32 %v606, %v627
        %v636 = vadd.f32 %v607, %v628
        %v637 = vadd.f32 %v608, %v629
        %v638 = vadd.f32 %v609, %v630
        %v639 = vadd.f32 %v610, %v631
        %v640 = vld [vmem:[%s229 + $0x9] sm:$0xff]
        %v641 = vld [vmem:[%s229 + $0x21] sm:$0xff]
        %v642 = vld [vmem:[%s229 + $0x39] sm:$0xff]
        %v643 = vld [vmem:[%s229 + $0x51] sm:$0xff]
        %v644 = vld [vmem:[%s229 + $0x69] sm:$0xff]
        %v645 = vld [vmem:[%s229 + $0x81] sm:$0xff]
        %v646 = vld [vmem:[%s229 + $0x99] sm:$0xff]
        %v647 = vld [vmem:[%s229 + $0xb1] sm:$0xff]
        %v648 = vld [vmem:[#allocation6 + $0xd] sm:$0x1]
        %v649 = vlaneseq
        %v650 = vshrl.u32 %v649, 7
        %v651 = vsub.s32 0, %v650
        %v652 = vrot.slane %v648, %v651
        %v653 = vmul.f32 %v640, %v652
        %v654 = vmul.f32 %v641, %v652
        %v655 = vmul.f32 %v642, %v652
        %v656 = vmul.f32 %v643, %v652
        %v657 = vmul.f32 %v644, %v652
        %v658 = vmul.f32 %v645, %v652
        %v659 = vmul.f32 %v646, %v652
        %v660 = vmul.f32 %v647, %v652
        %v661 = vadd.f32 %v632, %v653
        %v662 = vadd.f32 %v633, %v654
        %v663 = vadd.f32 %v634, %v655
        %v664 = vadd.f32 %v635, %v656
        %v665 = vadd.f32 %v636, %v657
        %v666 = vadd.f32 %v637, %v658
        %v667 = vadd.f32 %v638, %v659
        %v668 = vadd.f32 %v639, %v660
        %v669 = vld [vmem:[%s229 + $0xa] sm:$0xff]
        %v670 = vld [vmem:[%s229 + $0x22] sm:$0xff]
        %v671 = vld [vmem:[%s229 + $0x3a] sm:$0xff]
        %v672 = vld [vmem:[%s229 + $0x52] sm:$0xff]
        %v673 = vld [vmem:[%s229 + $0x6a] sm:$0xff]
        %v674 = vld [vmem:[%s229 + $0x82] sm:$0xff]
        %v675 = vld [vmem:[%s229 + $0x9a] sm:$0xff]
        %v676 = vld [vmem:[%s229 + $0xb2] sm:$0xff]
        %v677 = vld [vmem:[#allocation6 + $0xe] sm:$0x1]
        %v678 = vlaneseq
        %v679 = vshrl.u32 %v678, 7
        %v680 = vsub.s32 0, %v679
        %v681 = vrot.slane %v677, %v680
        %v682 = vmul.f32 %v669, %v681
        %v683 = vmul.f32 %v670, %v681
        %v684 = vmul.f32 %v671, %v681
        %v685 = vmul.f32 %v672, %v681
        %v686 = vmul.f32 %v673, %v681
        %v687 = vmul.f32 %v674, %v681
        %v688 = vmul.f32 %v675, %v681
        %v689 = vmul.f32 %v676, %v681
        %v690 = vadd.f32 %v661, %v682
        %v691 = vadd.f32 %v662, %v683
        %v692 = vadd.f32 %v663, %v684
        %v693 = vadd.f32 %v664, %v685
        %v694 = vadd.f32 %v665, %v686
        %v695 = vadd.f32 %v666, %v687
        %v696 = vadd.f32 %v667, %v688
        %v697 = vadd.f32 %v668, %v689
        %s698 = scalar_lea.vmem [#allocation2], 72
        %v699 = vld [vmem:[%s698 + $0x6] sm:$0xff]
        %v700 = vld [vmem:[%s698 + $0x1e] sm:$0xff]
        %v701 = vld [vmem:[%s698 + $0x36] sm:$0xff]
        %v702 = vld [vmem:[%s698 + $0x4e] sm:$0xff]
        %v703 = vld [vmem:[%s698 + $0x66] sm:$0xff]
        %v704 = vld [vmem:[%s698 + $0x7e] sm:$0xff]
        %v705 = vld [vmem:[%s698 + $0x96] sm:$0xff]
        %v706 = vld [vmem:[%s698 + $0xae] sm:$0xff]
        %v707 = vld [vmem:[#allocation6 + $0xf] sm:$0x1]
        %v708 = vlaneseq
        %v709 = vshrl.u32 %v708, 7
        %v710 = vsub.s32 0, %v709
        %v711 = vrot.slane %v707, %v710
        %v712 = vmul.f32 %v699, %v711
        %v713 = vmul.f32 %v700, %v711
        %v714 = vmul.f32 %v701, %v711
        %v715 = vmul.f32 %v702, %v711
        %v716 = vmul.f32 %v703, %v711
        %v717 = vmul.f32 %v704, %v711
        %v718 = vmul.f32 %v705, %v711
        %v719 = vmul.f32 %v706, %v711
        %v720 = vadd.f32 %v690, %v712
        %v721 = vadd.f32 %v691, %v713
        %v722 = vadd.f32 %v692, %v714
        %v723 = vadd.f32 %v693, %v715
        %v724 = vadd.f32 %v694, %v716
        %v725 = vadd.f32 %v695, %v717
        %v726 = vadd.f32 %v696, %v718
        %v727 = vadd.f32 %v697, %v719
        %v728 = vld [vmem:[%s698 + $0x7] sm:$0xff]
        %v729 = vld [vmem:[%s698 + $0x1f] sm:$0xff]
        %v730 = vld [vmem:[%s698 + $0x37] sm:$0xff]
        %v731 = vld [vmem:[%s698 + $0x4f] sm:$0xff]
        %v732 = vld [vmem:[%s698 + $0x67] sm:$0xff]
        %v733 = vld [vmem:[%s698 + $0x7f] sm:$0xff]
        %v734 = vld [vmem:[%s698 + $0x97] sm:$0xff]
        %v735 = vld [vmem:[%s698 + $0xaf] sm:$0xff]
        %v736 = vld [vmem:[#allocation6 + $0x10] sm:$0x1]
        %v737 = vlaneseq
        %v738 = vshrl.u32 %v737, 7
        %v739 = vsub.s32 0, %v738
        %v740 = vrot.slane %v736, %v739
        %v741 = vmul.f32 %v728, %v740
        %v742 = vmul.f32 %v729, %v740
        %v743 = vmul.f32 %v730, %v740
        %v744 = vmul.f32 %v731, %v740
        %v745 = vmul.f32 %v732, %v740
        %v746 = vmul.f32 %v733, %v740
        %v747 = vmul.f32 %v734, %v740
        %v748 = vmul.f32 %v735, %v740
        %v749 = vadd.f32 %v720, %v741
        %v750 = vadd.f32 %v721, %v742
        %v751 = vadd.f32 %v722, %v743
        %v752 = vadd.f32 %v723, %v744
        %v753 = vadd.f32 %v724, %v745
        %v754 = vadd.f32 %v725, %v746
        %v755 = vadd.f32 %v726, %v747
        %v756 = vadd.f32 %v727, %v748
        %v757 = vld [vmem:[%s698 + $0x8] sm:$0xff]
        %v758 = vld [vmem:[%s698 + $0x20] sm:$0xff]
        %v759 = vld [vmem:[%s698 + $0x38] sm:$0xff]
        %v760 = vld [vmem:[%s698 + $0x50] sm:$0xff]
        %v761 = vld [vmem:[%s698 + $0x68] sm:$0xff]
        %v762 = vld [vmem:[%s698 + $0x80] sm:$0xff]
        %v763 = vld [vmem:[%s698 + $0x98] sm:$0xff]
        %v764 = vld [vmem:[%s698 + $0xb0] sm:$0xff]
        %v765 = vld [vmem:[#allocation6 + $0x11] sm:$0x1]
        %v766 = vlaneseq
        %v767 = vshrl.u32 %v766, 7
        %v768 = vsub.s32 0, %v767
        %v769 = vrot.slane %v765, %v768
        %v770 = vmul.f32 %v757, %v769
        %v771 = vmul.f32 %v758, %v769
        %v772 = vmul.f32 %v759, %v769
        %v773 = vmul.f32 %v760, %v769
        %v774 = vmul.f32 %v761, %v769
        %v775 = vmul.f32 %v762, %v769
        %v776 = vmul.f32 %v763, %v769
        %v777 = vmul.f32 %v764, %v769
        %v778 = vadd.f32 %v749, %v770
        %v779 = vadd.f32 %v750, %v771
        %v780 = vadd.f32 %v751, %v772
        %v781 = vadd.f32 %v752, %v773
        %v782 = vadd.f32 %v753, %v774
        %v783 = vadd.f32 %v754, %v775
        %v784 = vadd.f32 %v755, %v776
        %v785 = vadd.f32 %v756, %v777
        %v786 = vld [vmem:[%s698 + $0x9] sm:$0xff]
        %v787 = vld [vmem:[%s698 + $0x21] sm:$0xff]
        %v788 = vld [vmem:[%s698 + $0x39] sm:$0xff]
        %v789 = vld [vmem:[%s698 + $0x51] sm:$0xff]
        %v790 = vld [vmem:[%s698 + $0x69] sm:$0xff]
        %v791 = vld [vmem:[%s698 + $0x81] sm:$0xff]
        %v792 = vld [vmem:[%s698 + $0x99] sm:$0xff]
        %v793 = vld [vmem:[%s698 + $0xb1] sm:$0xff]
        %v794 = vld [vmem:[#allocation6 + $0x12] sm:$0x1]
        %v795 = vlaneseq
        %v796 = vshrl.u32 %v795, 7
        %v797 = vsub.s32 0, %v796
        %v798 = vrot.slane %v794, %v797
        %v799 = vmul.f32 %v786, %v798
        %v800 = vmul.f32 %v787, %v798
        %v801 = vmul.f32 %v788, %v798
        %v802 = vmul.f32 %v789, %v798
        %v803 = vmul.f32 %v790, %v798
        %v804 = vmul.f32 %v791, %v798
        %v805 = vmul.f32 %v792, %v798
        %v806 = vmul.f32 %v793, %v798
        %v807 = vadd.f32 %v778, %v799
        %v808 = vadd.f32 %v779, %v800
        %v809 = vadd.f32 %v780, %v801
        %v810 = vadd.f32 %v781, %v802
        %v811 = vadd.f32 %v782, %v803
        %v812 = vadd.f32 %v783, %v804
        %v813 = vadd.f32 %v784, %v805
        %v814 = vadd.f32 %v785, %v806
        %v815 = vld [vmem:[%s698 + $0xa] sm:$0xff]
        %v816 = vld [vmem:[%s698 + $0x22] sm:$0xff]
        %v817 = vld [vmem:[%s698 + $0x3a] sm:$0xff]
        %v818 = vld [vmem:[%s698 + $0x52] sm:$0xff]
        %v819 = vld [vmem:[%s698 + $0x6a] sm:$0xff]
        %v820 = vld [vmem:[%s698 + $0x82] sm:$0xff]
        %v821 = vld [vmem:[%s698 + $0x9a] sm:$0xff]
        %v822 = vld [vmem:[%s698 + $0xb2] sm:$0xff]
        %v823 = vld [vmem:[#allocation6 + $0x13] sm:$0x1]
        %v824 = vlaneseq
        %v825 = vshrl.u32 %v824, 7
        %v826 = vsub.s32 0, %v825
        %v827 = vrot.slane %v823, %v826
        %v828 = vmul.f32 %v815, %v827
        %v829 = vmul.f32 %v816, %v827
        %v830 = vmul.f32 %v817, %v827
        %v831 = vmul.f32 %v818, %v827
        %v832 = vmul.f32 %v819, %v827
        %v833 = vmul.f32 %v820, %v827
        %v834 = vmul.f32 %v821, %v827
        %v835 = vmul.f32 %v822, %v827
        %v836 = vadd.f32 %v807, %v828
        %v837 = vadd.f32 %v808, %v829
        %v838 = vadd.f32 %v809, %v830
        %v839 = vadd.f32 %v810, %v831
        %v840 = vadd.f32 %v811, %v832
        %v841 = vadd.f32 %v812, %v833
        %v842 = vadd.f32 %v813, %v834
        %v843 = vadd.f32 %v814, %v835
        %s844 = scalar_lea.vmem [#allocation2], 96
        %v845 = vld [vmem:[%s844 + $0x6] sm:$0xff]
        %v846 = vld [vmem:[%s844 + $0x1e] sm:$0xff]
        %v847 = vld [vmem:[%s844 + $0x36] sm:$0xff]
        %v848 = vld [vmem:[%s844 + $0x4e] sm:$0xff]
        %v849 = vld [vmem:[%s844 + $0x66] sm:$0xff]
        %v850 = vld [vmem:[%s844 + $0x7e] sm:$0xff]
        %v851 = vld [vmem:[%s844 + $0x96] sm:$0xff]
        %v852 = vld [vmem:[%s844 + $0xae] sm:$0xff]
        %v853 = vld [vmem:[#allocation6 + $0x14] sm:$0x1]
        %v854 = vlaneseq
        %v855 = vshrl.u32 %v854, 7
        %v856 = vsub.s32 0, %v855
        %v857 = vrot.slane %v853, %v856
        %v858 = vmul.f32 %v845, %v857
        %v859 = vmul.f32 %v846, %v857
        %v860 = vmul.f32 %v847, %v857
        %v861 = vmul.f32 %v848, %v857
        %v862 = vmul.f32 %v849, %v857
        %v863 = vmul.f32 %v850, %v857
        %v864 = vmul.f32 %v851, %v857
        %v865 = vmul.f32 %v852, %v857
        %v866 = vadd.f32 %v836, %v858
        %v867 = vadd.f32 %v837, %v859
        %v868 = vadd.f32 %v838, %v860
        %v869 = vadd.f32 %v839, %v861
        %v870 = vadd.f32 %v840, %v862
        %v871 = vadd.f32 %v841, %v863
        %v872 = vadd.f32 %v842, %v864
        %v873 = vadd.f32 %v843, %v865
        %v874 = vld [vmem:[%s844 + $0x7] sm:$0xff]
        %v875 = vld [vmem:[%s844 + $0x1f] sm:$0xff]
        %v876 = vld [vmem:[%s844 + $0x37] sm:$0xff]
        %v877 = vld [vmem:[%s844 + $0x4f] sm:$0xff]
        %v878 = vld [vmem:[%s844 + $0x67] sm:$0xff]
        %v879 = vld [vmem:[%s844 + $0x7f] sm:$0xff]
        %v880 = vld [vmem:[%s844 + $0x97] sm:$0xff]
        %v881 = vld [vmem:[%s844 + $0xaf] sm:$0xff]
        %v882 = vld [vmem:[#allocation6 + $0x15] sm:$0x1]
        %v883 = vlaneseq
        %v884 = vshrl.u32 %v883, 7
        %v885 = vsub.s32 0, %v884
        %v886 = vrot.slane %v882, %v885
        %v887 = vmul.f32 %v874, %v886
        %v888 = vmul.f32 %v875, %v886
        %v889 = vmul.f32 %v876, %v886
        %v890 = vmul.f32 %v877, %v886
        %v891 = vmul.f32 %v878, %v886
        %v892 = vmul.f32 %v879, %v886
        %v893 = vmul.f32 %v880, %v886
        %v894 = vmul.f32 %v881, %v886
        %v895 = vadd.f32 %v866, %v887
        %v896 = vadd.f32 %v867, %v888
        %v897 = vadd.f32 %v868, %v889
        %v898 = vadd.f32 %v869, %v890
        %v899 = vadd.f32 %v870, %v891
        %v900 = vadd.f32 %v871, %v892
        %v901 = vadd.f32 %v872, %v893
        %v902 = vadd.f32 %v873, %v894
        %v903 = vld [vmem:[%s844 + $0x8] sm:$0xff]
        %v904 = vld [vmem:[%s844 + $0x20] sm:$0xff]
        %v905 = vld [vmem:[%s844 + $0x38] sm:$0xff]
        %v906 = vld [vmem:[%s844 + $0x50] sm:$0xff]
        %v907 = vld [vmem:[%s844 + $0x68] sm:$0xff]
        %v908 = vld [vmem:[%s844 + $0x80] sm:$0xff]
        %v909 = vld [vmem:[%s844 + $0x98] sm:$0xff]
        %v910 = vld [vmem:[%s844 + $0xb0] sm:$0xff]
        %v911 = vld [vmem:[#allocation6 + $0x16] sm:$0x1]
        %v912 = vlaneseq
        %v913 = vshrl.u32 %v912, 7
        %v914 = vsub.s32 0, %v913
        %v915 = vrot.slane %v911, %v914
        %v916 = vmul.f32 %v903, %v915
        %v917 = vmul.f32 %v904, %v915
        %v918 = vmul.f32 %v905, %v915
        %v919 = vmul.f32 %v906, %v915
        %v920 = vmul.f32 %v907, %v915
        %v921 = vmul.f32 %v908, %v915
        %v922 = vmul.f32 %v909, %v915
        %v923 = vmul.f32 %v910, %v915
        %v924 = vadd.f32 %v895, %v916
        %v925 = vadd.f32 %v896, %v917
        %v926 = vadd.f32 %v897, %v918
        %v927 = vadd.f32 %v898, %v919
        %v928 = vadd.f32 %v899, %v920
        %v929 = vadd.f32 %v900, %v921
        %v930 = vadd.f32 %v901, %v922
        %v931 = vadd.f32 %v902, %v923
        %v932 = vld [vmem:[%s844 + $0x9] sm:$0xff]
        %v933 = vld [vmem:[%s844 + $0x21] sm:$0xff]
        %v934 = vld [vmem:[%s844 + $0x39] sm:$0xff]
        %v935 = vld [vmem:[%s844 + $0x51] sm:$0xff]
        %v936 = vld [vmem:[%s844 + $0x69] sm:$0xff]
        %v937 = vld [vmem:[%s844 + $0x81] sm:$0xff]
        %v938 = vld [vmem:[%s844 + $0x99] sm:$0xff]
        %v939 = vld [vmem:[%s844 + $0xb1] sm:$0xff]
        %v940 = vld [vmem:[#allocation6 + $0x17] sm:$0x1]
        %v941 = vlaneseq
        %v942 = vshrl.u32 %v941, 7
        %v943 = vsub.s32 0, %v942
        %v944 = vrot.slane %v940, %v943
        %v945 = vmul.f32 %v932, %v944
        %v946 = vmul.f32 %v933, %v944
        %v947 = vmul.f32 %v934, %v944
        %v948 = vmul.f32 %v935, %v944
        %v949 = vmul.f32 %v936, %v944
        %v950 = vmul.f32 %v937, %v944
        %v951 = vmul.f32 %v938, %v944
        %v952 = vmul.f32 %v939, %v944
        %v953 = vadd.f32 %v924, %v945
        %v954 = vadd.f32 %v925, %v946
        %v955 = vadd.f32 %v926, %v947
        %v956 = vadd.f32 %v927, %v948
        %v957 = vadd.f32 %v928, %v949
        %v958 = vadd.f32 %v929, %v950
        %v959 = vadd.f32 %v930, %v951
        %v960 = vadd.f32 %v931, %v952
        %v961 = vld [vmem:[%s844 + $0xa] sm:$0xff]
        %v962 = vld [vmem:[%s844 + $0x22] sm:$0xff]
        %v963 = vld [vmem:[%s844 + $0x3a] sm:$0xff]
        %v964 = vld [vmem:[%s844 + $0x52] sm:$0xff]
        %v965 = vld [vmem:[%s844 + $0x6a] sm:$0xff]
        %v966 = vld [vmem:[%s844 + $0x82] sm:$0xff]
        %v967 = vld [vmem:[%s844 + $0x9a] sm:$0xff]
        %v968 = vld [vmem:[%s844 + $0xb2] sm:$0xff]
        %v969 = vld [vmem:[#allocation6 + $0x18] sm:$0x1]
        %v970 = vlaneseq
        %v971 = vshrl.u32 %v970, 7
        %v972 = vsub.s32 0, %v971
        %v973 = vrot.slane %v969, %v972
        %v974 = vmul.f32 %v961, %v973
        %v975 = vmul.f32 %v962, %v973
        %v976 = vmul.f32 %v963, %v973
        %v977 = vmul.f32 %v964, %v973
        %v978 = vmul.f32 %v965, %v973
        %v979 = vmul.f32 %v966, %v973
        %v980 = vmul.f32 %v967, %v973
        %v981 = vmul.f32 %v968, %v973
        %v982 = vadd.f32 %v953, %v974
        %v983 = vadd.f32 %v954, %v975
        %v984 = vadd.f32 %v955, %v976
        %v985 = vadd.f32 %v956, %v977
        %v986 = vadd.f32 %v957, %v978
        %v987 = vadd.f32 %v958, %v979
        %v988 = vadd.f32 %v959, %v980
        %v989 = vadd.f32 %v960, %v981
        %990 = vst.msk [vmem:[%s207] sm:$0xff] %vm215, %v982
        %991 = vst.msk [vmem:[%s207 + $0x8] sm:$0xff] %vm215, %v983
        %992 = vst.msk [vmem:[%s207 + $0x10] sm:$0xff] %vm215, %v984
        %993 = vst.msk [vmem:[%s207 + $0x18] sm:$0xff] %vm215, %v985
        %994 = vst.msk [vmem:[%s207 + $0x20] sm:$0xff] %vm215, %v986
        %995 = vst.msk [vmem:[%s207 + $0x28] sm:$0xff] %vm215, %v987
        %996 = vst.msk [vmem:[%s207 + $0x30] sm:$0xff] %vm215, %v988
        %997 = vst.msk [vmem:[%s207 + $0x38] sm:$0xff] %vm215, %v989
        %v998 = vcombine.low %v982, %v984
        %v999 = vcombine.high %v982, %v984
        %v1001 = vunpack.c.l.s4 1983009808
        %v1002 = vunpack.c.0.s8 %v1001
        %v1003 = vlaneseq
        %v1004 = vshrl.u32 %v1003, 7
        %v1005 = vsub.s32 %v1002, %v1004
        %v1006 = vrot.slane %v998, %v1005
        %v1008 = vunpack.c.l.s4 1983009808
        %v1009 = vunpack.c.0.s8 %v1008
        %v1010 = vlaneseq
        %v1011 = vshrl.u32 %v1010, 7
        %v1012 = vsub.s32 %v1009, %v1011
        %v1013 = vrot.slane %v999, %v1012
        %v1014 = vcombine.low %v983, %v985
        %v1015 = vcombine.high %v983, %v985
        %v1017 = vunpack.c.l.s4 1983009808
        %v1018 = vunpack.c.0.s8 %v1017
        %v1019 = vlaneseq
        %v1020 = vshrl.u32 %v1019, 7
        %v1021 = vsub.s32 %v1018, %v1020
        %v1022 = vrot.slane %v1014, %v1021
        %v1024 = vunpack.c.l.s4 1983009808
        %v1025 = vunpack.c.0.s8 %v1024
        %v1026 = vlaneseq
        %v1027 = vshrl.u32 %v1026, 7
        %v1028 = vsub.s32 %v1025, %v1027
        %v1029 = vrot.slane %v1015, %v1028
        %v1030 = vcombine.low %v986, %v988
        %v1031 = vcombine.high %v986, %v988
        %v1033 = vunpack.c.l.s4 1983009808
        %v1034 = vunpack.c.0.s8 %v1033
        %v1035 = vlaneseq
        %v1036 = vshrl.u32 %v1035, 7
        %v1037 = vsub.s32 %v1034, %v1036
        %v1038 = vrot.slane %v1030, %v1037
        %v1040 = vunpack.c.l.s4 1983009808
        %v1041 = vunpack.c.0.s8 %v1040
        %v1042 = vlaneseq
        %v1043 = vshrl.u32 %v1042, 7
        %v1044 = vsub.s32 %v1041, %v1043
        %v1045 = vrot.slane %v1031, %v1044
        %v1046 = vcombine.low %v987, %v989
        %v1047 = vcombine.high %v987, %v989
        %v1049 = vunpack.c.l.s4 1983009808
        %v1050 = vunpack.c.0.s8 %v1049
        %v1051 = vlaneseq
        %v1052 = vshrl.u32 %v1051, 7
        %v1053 = vsub.s32 %v1050, %v1052
        %v1054 = vrot.slane %v1046, %v1053
        %v1056 = vunpack.c.l.s4 1983009808
        %v1057 = vunpack.c.0.s8 %v1056
        %v1058 = vlaneseq
        %v1059 = vshrl.u32 %v1058, 7
        %v1060 = vsub.s32 %v1057, %v1059
        %v1061 = vrot.slane %v1047, %v1060
        %v1062 = vcombine.low %v1006, %v1022
        %v1063 = vcombine.high %v1006, %v1022
        %v1065 = vunpack.c.l.s4 1934713408
        %v1066 = vunpack.c.0.s8 %v1065
        %v1067 = vlaneseq
        %v1068 = vshrl.u32 %v1067, 7
        %v1069 = vsub.s32 %v1066, %v1068
        %v1070 = vrot.slane %v1062, %v1069
        %v1072 = vunpack.c.l.s4 1934713408
        %v1073 = vunpack.c.0.s8 %v1072
        %v1074 = vlaneseq
        %v1075 = vshrl.u32 %v1074, 7
        %v1076 = vsub.s32 %v1073, %v1075
        %v1077 = vrot.slane %v1063, %v1076
        %v1078 = vcombine.low %v1013, %v1029
        %v1079 = vcombine.high %v1013, %v1029
        %v1081 = vunpack.c.l.s4 1934713408
        %v1082 = vunpack.c.0.s8 %v1081
        %v1083 = vlaneseq
        %v1084 = vshrl.u32 %v1083, 7
        %v1085 = vsub.s32 %v1082, %v1084
        %v1086 = vrot.slane %v1078, %v1085
        %v1088 = vunpack.c.l.s4 1934713408
        %v1089 = vunpack.c.0.s8 %v1088
        %v1090 = vlaneseq
        %v1091 = vshrl.u32 %v1090, 7
        %v1092 = vsub.s32 %v1089, %v1091
        %v1093 = vrot.slane %v1079, %v1092
        %v1094 = vcombine.low %v1038, %v1054
        %v1095 = vcombine.high %v1038, %v1054
        %v1097 = vunpack.c.l.s4 1934713408
        %v1098 = vunpack.c.0.s8 %v1097
        %v1099 = vlaneseq
        %v1100 = vshrl.u32 %v1099, 7
        %v1101 = vsub.s32 %v1098, %v1100
        %v1102 = vrot.slane %v1094, %v1101
        %v1104 = vunpack.c.l.s4 1934713408
        %v1105 = vunpack.c.0.s8 %v1104
        %v1106 = vlaneseq
        %v1107 = vshrl.u32 %v1106, 7
        %v1108 = vsub.s32 %v1105, %v1107
        %v1109 = vrot.slane %v1095, %v1108
        %v1110 = vcombine.low %v1045, %v1061
        %v1111 = vcombine.high %v1045, %v1061
        %v1113 = vunpack.c.l.s4 1934713408
        %v1114 = vunpack.c.0.s8 %v1113
        %v1115 = vlaneseq
        %v1116 = vshrl.u32 %v1115, 7
        %v1117 = vsub.s32 %v1114, %v1116
        %v1118 = vrot.slane %v1110, %v1117
        %v1120 = vunpack.c.l.s4 1934713408
        %v1121 = vunpack.c.0.s8 %v1120
        %v1122 = vlaneseq
        %v1123 = vshrl.u32 %v1122, 7
        %v1124 = vsub.s32 %v1121, %v1123
        %v1125 = vrot.slane %v1111, %v1124
        %v1126 = vcombine.low %v1070, %v1102
        %v1127 = vcombine.high %v1070, %v1102
        %v1128 = vcombine.low %v1077, %v1109
        %v1129 = vcombine.high %v1077, %v1109
        %v1130 = vcombine.low %v1086, %v1118
        %v1131 = vcombine.high %v1086, %v1118
        %v1132 = vcombine.low %v1093, %v1125
        %v1133 = vcombine.high %v1093, %v1125
        %1134 = vst.msk [vmem:[%s214] sm:$0xff] %vm215, %v1126
        %1135 = vst.msk [vmem:[%s214 + $0x8] sm:$0xff] %vm215, %v1127
        %1136 = vst.msk [vmem:[%s214 + $0x10] sm:$0xff] %vm215, %v1128
        %1137 = vst.msk [vmem:[%s214 + $0x18] sm:$0xff] %vm215, %v1129
        %1138 = vst.msk [vmem:[%s214 + $0x20] sm:$0xff] %vm215, %v1130
        %1139 = vst.msk [vmem:[%s214 + $0x28] sm:$0xff] %vm215, %v1131
        %1140 = vst.msk [vmem:[%s214 + $0x30] sm:$0xff] %vm215, %v1132
        %1141 = vst.msk [vmem:[%s214 + $0x38] sm:$0xff] %vm215, %v1133
        %s1142 = sand.u32 %s80, 1
        %s1143 = scalar_lea.sflag [#allocation5], %s1142
        %s1144 = sand.u32 %s80, 1
        %s1145 = smul.addr %s1144, 64
        %s1146 = scalar_lea.vmem [#allocation8], %s1145
        %s1147 = sand.u32 %s106, 1
        %s1148 = scalar_lea.sflag [#allocation10], %s1147
        %s1149 = sand.u32 %s106, 1
        %s1150 = smul.addr %s1149, 64
        %s1151 = scalar_lea.vmem [#allocation9], %s1150
        // Predicated region
        $region37: #{tpu_custom_call.1} parent=27 // pred_check
          %p1152 = pneg %p90
        $region38: #{tpu_custom_call.1} parent=27 // pred_check_branch
          %1154 = sbr.rel (%p1152) target = $region40
        $region39: #{tpu_custom_call.1} parent=27 // pred_region
          %s1156 = ssub.s32 1024, 1024
          %1157 = vsyncadd %s1143, %s1156
          %s1158 = smul.addr %s25, 8
          %s1159 = smul.addr %s1158, 128
          %s1160 = scalar_lea.hbm %s2, %s1159
          %s1161 = sshll.u32 %s1146, 4
          %s1162 = int_to_ptr.vmem [resolvable:$true] %s1161
          %1167 = dma.vmem_to_hbm [thread:$0]  %s1162, 1024, %s1160, %s1143, 128, 128, 8
        $region40: #{tpu_custom_call.1} parent=27 // pred_fallthru
          _
        // Predicated region
        $region41: #{tpu_custom_call.1} parent=27 // pred_check
          %p1168 = pneg %p116
        $region42: #{tpu_custom_call.1} parent=27 // pred_check_branch
          %1170 = sbr.rel (%p1168) target = $region44
        $region43: #{tpu_custom_call.1} parent=27 // pred_region
          %s1172 = ssub.s32 1024, 1024
          %1173 = vsyncadd %s1148, %s1172
          %s1174 = smul.addr %s25, 8
          %s1175 = smul.addr %s1174, 128
          %s1176 = scalar_lea.hbm %s3, %s1175
          %s1177 = sshll.u32 %s1151, 4
          %s1178 = int_to_ptr.vmem [resolvable:$true] %s1177
          %1183 = dma.vmem_to_hbm [thread:$0]  %s1178, 1024, %s1176, %s1148, 128, 128, 8
        $region44: #{tpu_custom_call.1} parent=27 // pred_fallthru
          _
      $region28: #{tpu_custom_call.1} parent=5 // pred_fallthru
        _
      %p1184 = scmp.le.s32.totalorder 2, %s20
      // Predicated region
      $region45: #{tpu_custom_call.1} parent=5 // pred_check
        %p1185 = pneg %p1184
      $region46: #{tpu_custom_call.1} parent=5 // pred_check_branch
        %1187 = sbr.rel (%p1185) target = $region48
      $region47: #{tpu_custom_call.1} parent=5 // pred_region
        %s1188 = ssub.s32 %s20, 2
        // Predicated region
        $region49: #{tpu_custom_call.1} parent=47 // pred_check
          %p1189 = pneg %p96
        $region50: #{tpu_custom_call.1} parent=47 // pred_check_branch
          %1191 = sbr.rel (%p1189) target = $region52
        $region51: #{tpu_custom_call.1} parent=47 // pred_region
          %s1192 = sand.u32 %s81, 1
          %s1193 = scalar_lea.sflag [#allocation5], %s1192
          %s1194 = sand.u32 %s81, 1
          %s1195 = smul.addr %s1194, 64
          %s1196 = scalar_lea.vmem [#allocation8], %s1195
          %1197 = dma.done %s1193, 1024
        $region52: #{tpu_custom_call.1} parent=47 // pred_fallthru
          _
        // Predicated region
        $region53: #{tpu_custom_call.1} parent=47 // pred_check
          %p1198 = pneg %p122
        $region54: #{tpu_custom_call.1} parent=47 // pred_check_branch
          %1200 = sbr.rel (%p1198) target = $region56
        $region55: #{tpu_custom_call.1} parent=47 // pred_region
          %s1201 = sand.u32 %s107, 1
          %s1202 = scalar_lea.sflag [#allocation10], %s1201
          %s1203 = sand.u32 %s107, 1
          %s1204 = smul.addr %s1203, 64
          %s1205 = scalar_lea.vmem [#allocation9], %s1204
          %1206 = dma.done %s1202, 1024
        $region56: #{tpu_custom_call.1} parent=47 // pred_fallthru
          _
      $region48: #{tpu_custom_call.1} parent=5 // pred_fallthru
        _
    $region6: #{tpu_custom_call.1} parent=1 // loop_footer
      %s24 = sadd.s32 1, %s20
    $region7: #{tpu_custom_call.1} parent=1 // loop_footer_branch
      %19 = sbr.rel target = $region3
    $region8: #{tpu_custom_call.1} parent=1 // loop_exit
      _
    %1207 = vsyncpa [#allocation4], 1
    %s1208 = scalar_lea.sflag [#allocation4], 1
    %1209 = vsyncpa %s1208, 1
    %1210 = vsyncpa [#allocation7], 1
    %1211 = vsyncpa [#allocation5], 1
    %s1212 = scalar_lea.sflag [#allocation5], 1
    %1213 = vsyncpa %s1212, 1
    %1214 = vsyncpa [#allocation10], 1
    %s1215 = scalar_lea.sflag [#allocation10], 1
    %1216 = vsyncpa %s1215, 1

</llo_original>
